<compile_context>
chip_gen: v7x
topology: tpu7x:2x2x1
jax: 0.10.0
libtpu: 0.0.40
codegen_flags: <defaults>
</compile_context>

<pallas_src>
import functools

import jax
import jax.numpy as jnp
from jax import lax
from jax.experimental import pallas as pl
from jax.experimental.pallas import tpu as pltpu

LANES = 128  # TPU lane width: channel axes touching MXU output / HBM store.


# ---------------------------------------------------------------------------
# Fused Pallas kernel: one grid step == `bt` images (batch folded into M).
# ---------------------------------------------------------------------------
def _fused_basic_block_kernel(x1_ref, w1_ref, b1_ref, s_ref, w2_ref, b2_ref,
                              out_ref, hpad_ref, *, bt, ho, wo, c0p):
    """Refs:
      x1_ref : (M, 9*Cin)  f32   conv1 im2col rows for this step (M=bt*Ho*Wo)
      w1_ref : (9*Cin, C0P) mm   conv1 weights, bn1 scale folded, lane-padded
      b1_ref : (1, C0P)    f32   bn1 bias (padded)
      s_ref  : (9*Cin, CoutP) f32  0/1 option-A shortcut projection
      w2_ref : (9, C0P, CoutP) mm  conv2 per-tap weights, bn2 + ChannelExpand folded
      b2_ref : (1, CoutP)  f32   bn2 bias (padded)
      out_ref: (M, CoutP)  f32
      hpad_ref: (bt, Ho+2, Wpad, C0P) mm  VMEM scratch: zero-padded conv1 act.
    """
    m = bt * ho * wo
    mm_dtype = w1_ref.dtype            # bf16 (fast path) or f32 (tight gate)

    x1 = x1_ref[...]                                           # (M, 9*Cin) f32

    # conv1 (+ folded bn1 scale): ONE MXU matmul, f32 accumulation, f32 epilogue.
    h = jnp.dot(x1.astype(mm_dtype), w1_ref[...],
                preferred_element_type=jnp.float32)            # (M, C0P)
    h = jnp.maximum(h + b1_ref[...], 0.0)

    # Option-A shortcut: the stride-subsampled input is the CENTER TAP of the
    # conv1 im2col; project it to its output-channel offset with a tiny 0/1
    # matmul.  Kept in f32 so the identity residual is exact under bf16 convs.
    sc = jnp.dot(x1, s_ref[...], preferred_element_type=jnp.float32)

    # Zero-padded conv1 activation kept resident in VMEM (no HBM round trip).
    # Only the halo strips are cleared; the interior is overwritten below.
    wop = hpad_ref.shape[2]
    zrow = jnp.zeros((bt, 1, wop, c0p), mm_dtype)
    hpad_ref[:, 0:1, :, :] = zrow
    hpad_ref[:, ho + 1:ho + 2, :, :] = zrow
    zcol = jnp.zeros((bt, ho + 2, 1, c0p), mm_dtype)
    hpad_ref[:, :, 0:1, :] = zcol
    hpad_ref[:, :, wo + 1:wo + 2, :] = zcol
    hpad_ref[:, 1:ho + 1, 1:wo + 1, :] = (
        h.reshape(bt, ho, wo, c0p).astype(mm_dtype))

    # conv2 (+ folded bn2 scale + ChannelExpand): accumulate 9 tap matmuls
    # (K = C0P each) straight from the resident activation — no materialized
    # im2col, no extra VMEM store/reload traffic.
    acc = sc + b2_ref[...]                                      # (M, CoutP) f32
    for k in range(9):
        dy, dx = divmod(k, 3)
        tap = hpad_ref[:, dy:dy + ho, dx:dx + wo, :].reshape(m, c0p)
        acc = acc + jnp.dot(tap, w2_ref[k], preferred_element_type=jnp.float32)

    # Residual + ReLU already folded into acc; (M, 128) store is lane-dense.
    out_ref[...] = jnp.maximum(acc, 0.0)


# ---------------------------------------------------------------------------
# One-time parameter preparation (hoisted out of the per-forward jit).
# ---------------------------------------------------------------------------
def _fold_bn(gamma, beta, mean, var, eps=1e-5):
    scale = gamma / jnp.sqrt(var + eps)
    return scale, beta - mean * scale


def prepare_basic_block(params, *, stride, in_planes, outplanes,
                        mm_dtype=jnp.bfloat16, eps=1e-5):
    """Folds BN into conv weights, pads channels, builds the shortcut
    projection. Call ONCE at model-load time; returns None for empty blocks."""
    w1, g1, b1, m1, v1, w2, g2, b2, m2, v2 = params
    c0 = w1.shape[-1]
    c1 = w2.shape[-1]
    if c0 == 0 or c1 == 0:
        return None

    k1 = 9 * in_planes
    c0p = coutp = LANES

    s1, bb1 = _fold_bn(g1, b1, m1, v1, eps)
    w1f = jnp.pad((w1 * s1).reshape(k1, c0),
                  ((0, 0), (0, c0p - c0))).astype(mm_dtype)
    b1f = jnp.pad(bb1, (0, c0p - c0)).reshape(1, c0p).astype(jnp.float32)

    # bn2 scale + ChannelExpand(outplanes): channels [c1, outplanes) are exact
    # zeros (zero weight columns + zero bias); [outplanes, 128) is lane padding.
    s2, bb2 = _fold_bn(g2, b2, m2, v2, eps)
    w2f = jnp.pad(w2 * s2, ((0, 0), (0, 0), (0, c0p - c0), (0, coutp - c1)))
    w2f = w2f.reshape(9, c0p, coutp).astype(mm_dtype)
    b2f = jnp.pad(bb2, (0, coutp - c1)).reshape(1, coutp).astype(jnp.float32)

    # Option-A shortcut projection: center tap (dy=1, dx=1) of the conv1
    # im2col, placed at channel offset outplanes//4 when downsampling.
    downsample = (stride != 1) or (in_planes != outplanes)
    ch_off = (outplanes // 4) if downsample else 0
    s_mat = jnp.zeros((k1, coutp), jnp.float32)
    s_mat = s_mat.at[4 * in_planes + jnp.arange(in_planes),
                     ch_off + jnp.arange(in_planes)].set(1.0)

    return dict(w1f=w1f, b1f=b1f, s_mat=s_mat, w2f=w2f, b2f=b2f)


# ---------------------------------------------------------------------------
# Forward: NHWC transpose + conv1 im2col + fused pallas_call + unpack.
# ---------------------------------------------------------------------------
def _im2col_3x3(x_nhwc, stride):
    """3x3 / pad=1 im2col, lane-packed as (N, Ho*Wo, 9*C)."""
    n, h, w, c = x_nhwc.shape
    ho = (h + 2 - 3) // stride + 1
    wo = (w + 2 - 3) // stride + 1
    xp = jnp.pad(x_nhwc, ((0, 0), (1, 1), (1, 1), (0, 0)))
    taps = []
    for dy in range(3):
        for dx in range(3):
            taps.append(xp[:, dy:dy + stride * (ho - 1) + 1:stride,
                           dx:dx + stride * (wo - 1) + 1:stride, :])
    col = jnp.concatenate(taps, axis=-1)                 # (N, Ho, Wo, 9*C)
    return col.reshape(n, ho * wo, 9 * c), (ho, wo)


@functools.partial(jax.jit, static_argnames=("stride", "in_planes",
                                             "outplanes"))
def basic_block_forward(x_nchw, packed, *, stride, in_planes, outplanes):
    x = jnp.transpose(x_nchw, (0, 2, 3, 1)).astype(jnp.float32)   # NHWC
    n = x.shape[0]
    downsample = (stride != 1) or (in_planes != outplanes)

    if packed is None:
        # Empty (fully pruned) block: relu(shortcut(x)) only — no compute to
        # kernelize.  TODO(synk): plain-JAX path for the pruned-empty block.
        if downsample:
            cp = outplanes // 4
            sc = jnp.pad(x[:, ::2, ::2, :], ((0, 0), (0, 0), (0, 0), (cp, cp)))
        else:
            sc = x
        return jnp.transpose(jnp.maximum(sc, 0.0), (0, 3, 1, 2))

    k1 = 9 * in_planes
    c0p = coutp = LANES
    mm_dtype = packed["w1f"].dtype

    # conv1 im2col (stride-2 -> ~2.25x raw input bytes), batch folded into M.
    x1, (ho, wo) = _im2col_3x3(x, stride)                 # (N, Ho*Wo, 9*Cin)
    rows = ho * wo
    x1 = x1.reshape(n * rows, k1)

    # Batch tile: target >= 512 matmul rows per grid step (whole batch here).
    bt = max(1, min(n, max(1, 512 // rows)))
    while n % bt:
        bt -= 1
    if (n // bt) > 1 and (bt * rows) % 8 != 0:
        bt = n          # keep the M block (8,128)-tileable
    m = bt * rows
    grid = (n // bt,)

    # Pad the W+2 sublane dim of the padded-activation scratch to 8.
    wop = ((wo + 2 + 7) // 8) * 8

    kernel = functools.partial(_fused_basic_block_kernel,
                               bt=bt, ho=ho, wo=wo, c0p=c0p)

    out = pl.pallas_call(
        kernel,
        out_shape=jax.ShapeDtypeStruct((n * rows, coutp), jnp.float32),
        grid_spec=pltpu.PrefetchScalarGridSpec(
            num_scalar_prefetch=0,
            grid=grid,
            in_specs=[
                pl.BlockSpec((m, k1), lambda i: (i, 0)),
                # Weights / biases / shortcut projection: constant index_maps
                # -> DMA'd once, VMEM-resident across grid steps.
                pl.BlockSpec((k1, c0p), lambda i: (0, 0)),
                pl.BlockSpec((1, c0p), lambda i: (0, 0)),
                pl.BlockSpec((k1, coutp), lambda i: (0, 0)),
                pl.BlockSpec((9, c0p, coutp), lambda i: (0, 0, 0)),
                pl.BlockSpec((1, coutp), lambda i: (0, 0)),
            ],
            out_specs=pl.BlockSpec((m, coutp), lambda i: (i, 0)),
            scratch_shapes=[
                pltpu.VMEM((bt, ho + 2, wop, c0p), mm_dtype),  # padded act.
            ]),
        compiler_params=pltpu.CompilerParams(
            # Independent batch-tile axis: shards across the 2 TensorCores on
            # v7x; harmless no-op on v5e / v6e.
            dimension_semantics=("parallel",)),
    )(x1, packed["w1f"], packed["b1f"], packed["s_mat"],
      packed["w2f"], packed["b2f"])

    out = out[:, :outplanes].reshape(n, ho, wo, outplanes)
    return jnp.transpose(out, (0, 3, 1, 2))


# ---------------------------------------------------------------------------
# Pure-JAX reference (independent of the kernel path) for verification.
# ---------------------------------------------------------------------------
def reference_forward(x_nchw, params, *, stride, in_planes, outplanes):
    w1, g1, b1, m1, v1, w2, g2, b2, m2, v2 = params
    c1 = w2.shape[-1]
    dn = ("NHWC", "HWIO", "NHWC")
    hp = lax.Precision.HIGHEST
    x = jnp.transpose(x_nchw, (0, 2, 3, 1)).astype(jnp.float32)

    s1, bb1 = _fold_bn(g1, b1, m1, v1)
    y = lax.conv_general_dilated(x, w1, (stride, stride), ((1, 1), (1, 1)),
                                 dimension_numbers=dn, precision=hp)
    y = jnp.maximum(y * s1 + bb1, 0.0)

    s2, bb2 = _fold_bn(g2, b2, m2, v2)
    z = lax.conv_general_dilated(y, w2, (1, 1), ((1, 1), (1, 1)),
                                 dimension_numbers=dn, precision=hp)
    z = z * s2 + bb2
    z = jnp.pad(z, ((0, 0), (0, 0), (0, 0), (0, outplanes - c1)))

    if stride != 1 or in_planes != outplanes:
        cp = outplanes // 4
        sc = jnp.pad(x[:, ::2, ::2, :], ((0, 0), (0, 0), (0, 0), (cp, cp)))
    else:
        sc = x
    out = jnp.maximum(z + sc, 0.0)
    return jnp.transpose(out, (0, 3, 1, 2))


# ---------------------------------------------------------------------------
if __name__ == "__main__":
    # BasicBlock(4, 8, cfg=[6, 6], stride=2, option='A'); x: (2, 4, 16, 16).
    in_planes, outplanes, cfg, stride = 4, 8, (6, 6), 2
    key = jax.random.PRNGKey(0)
    ks = jax.random.split(key, 11)

    x = jax.random.normal(ks[0], (2, in_planes, 16, 16), jnp.float32)

    # Conv weights stored HWIO (3, 3, Cin, Cout); BN params in eval mode.
    w1 = jax.random.normal(ks[1], (3, 3, in_planes, cfg[0]), jnp.float32) * 0.2
    g1 = jax.random.uniform(ks[2], (cfg[0],), jnp.float32, 0.5, 1.5)
    b1 = jax.random.normal(ks[3], (cfg[0],), jnp.float32) * 0.1
    m1 = jax.random.normal(ks[4], (cfg[0],), jnp.float32) * 0.1
    v1 = jax.random.uniform(ks[5], (cfg[0],), jnp.float32, 0.5, 1.5)

    w2 = jax.random.normal(ks[6], (3, 3, cfg[0], cfg[1]), jnp.float32) * 0.2
    g2 = jax.random.uniform(ks[7], (cfg[1],), jnp.float32, 0.5, 1.5)
    b2 = jax.random.normal(ks[8], (cfg[1],), jnp.float32) * 0.1
    m2 = jax.random.normal(ks[9], (cfg[1],), jnp.float32) * 0.1
    v2 = jax.random.uniform(ks[10], (cfg[1],), jnp.float32, 0.5, 1.5)

    params = (w1, g1, b1, m1, v1, w2, g2, b2, m2, v2)

    ref = reference_forward(x, params, stride=stride,
                            in_planes=in_planes, outplanes=outplanes)
    ref = jax.block_until_ready(ref)
    scale = float(jnp.max(jnp.abs(ref)))

    # --- f32 matmul path: tight correctness gate. ---
    packed32 = prepare_basic_block(params, stride=stride, in_planes=in_planes,
                                   outplanes=outplanes, mm_dtype=jnp.float32)
    out32 = basic_block_forward(x, packed32, stride=stride,
                                in_planes=in_planes, outplanes=outplanes)
    out32 = jax.block_until_ready(out32)
    assert out32.shape == (2, outplanes, 8, 8), out32.shape
    err32 = float(jnp.max(jnp.abs(out32 - ref)))
    assert err32 <= 1e-3 + 3e-3 * scale, ("f32 path error", err32, scale)

    # --- bf16 matmul path (fast path): separate, documented looser gate. ---
    packed16 = prepare_basic_block(params, stride=stride, in_planes=in_planes,
                                   outplanes=outplanes, mm_dtype=jnp.bfloat16)
    out16 = basic_block_forward(x, packed16, stride=stride,
                                in_planes=in_planes, outplanes=outplanes)
    out16 = jax.block_until_ready(out16)
    assert out16.shape == (2, outplanes, 8, 8), out16.shape
    err16 = float(jnp.max(jnp.abs(out16 - ref)))
    assert err16 <= 1e-2 + 2e-2 * scale, ("bf16 path error", err16, scale)

    print("KERNEL_OK")
</pallas_src>

<mosaic_0001>
module attributes {stable_mosaic.version = 11 : i64} {
  func.func @_fused_basic_block_kernel(%arg0: i32, %arg1: memref<128x36xf32, #tpu.memory_space<vmem>>, %arg2: memref<36x128xf32, #tpu.memory_space<vmem>>, %arg3: memref<1x128xf32, #tpu.memory_space<vmem>>, %arg4: memref<36x128xf32, #tpu.memory_space<vmem>>, %arg5: memref<9x128x128xf32, #tpu.memory_space<vmem>>, %arg6: memref<1x128xf32, #tpu.memory_space<vmem>>, %arg7: memref<128x128xf32, #tpu.memory_space<vmem>>, %arg8: memref<2x10x16x128xf32, #tpu.memory_space<vmem>>) attributes {dimension_semantics = [#tpu.dimension_semantics<parallel>], iteration_bounds = array<i64: 1>, scalar_prefetch = 0 : i64, scratch_operands = 1 : i64, tpu.core_type = #tpu.core_type<tc>, window_params = [{transform_indices = @transform_0, window_bounds = array<i64: 128, 36>}, {pipeline_mode = #tpu.pipeline_mode<synchronous>, transform_indices = @transform_1, window_bounds = array<i64: 36, 128>}, {pipeline_mode = #tpu.pipeline_mode<synchronous>, transform_indices = @transform_2, window_bounds = array<i64: 1, 128>}, {pipeline_mode = #tpu.pipeline_mode<synchronous>, transform_indices = @transform_3, window_bounds = array<i64: 36, 128>}, {pipeline_mode = #tpu.pipeline_mode<synchronous>, transform_indices = @transform_4, window_bounds = array<i64: 9, 128, 128>}, {pipeline_mode = #tpu.pipeline_mode<synchronous>, transform_indices = @transform_5, window_bounds = array<i64: 1, 128>}, {transform_indices = @transform_6, window_bounds = array<i64: 128, 128>}]} {
    %c0 = arith.constant 0 : index
    %c0_0 = arith.constant 0 : index
    %0 = vector.load %arg1[%c0, %c0_0] : memref<128x36xf32, #tpu.memory_space<vmem>>, vector<128x36xf32>
    %c0_1 = arith.constant 0 : index
    %c0_2 = arith.constant 0 : index
    %1 = vector.load %arg2[%c0_1, %c0_2] : memref<36x128xf32, #tpu.memory_space<vmem>>, vector<36x128xf32>
    %cst = arith.constant dense<0.000000e+00> : vector<128x128xf32>
    %2 = tpu.matmul %0, %1, %cst {dimension_numbers = #tpu.dot_dimension_numbers<[1], [0], [0], [1], [0, 0, 1, 1], [], []>} : vector<128x36xf32>, vector<36x128xf32>, vector<128x128xf32> -> vector<128x128xf32>
    %c0_3 = arith.constant 0 : index
    %c0_4 = arith.constant 0 : index
    %3 = vector.load %arg3[%c0_3, %c0_4] : memref<1x128xf32, #tpu.memory_space<vmem>>, vector<1x128xf32>
    %4 = vector.broadcast %3 : vector<1x128xf32> to vector<128x128xf32>
    %5 = arith.addf %2, %4 : vector<128x128xf32>
    %cst_5 = arith.constant 0.000000e+00 : f32
    %6 = vector.broadcast %cst_5 : f32 to vector<128x128xf32>
    %7 = arith.maximumf %5, %6 : vector<128x128xf32>
    %c0_6 = arith.constant 0 : index
    %c0_7 = arith.constant 0 : index
    %8 = vector.load %arg4[%c0_6, %c0_7] : memref<36x128xf32, #tpu.memory_space<vmem>>, vector<36x128xf32>
    %cst_8 = arith.constant dense<0.000000e+00> : vector<128x128xf32>
    %9 = tpu.matmul %0, %8, %cst_8 {dimension_numbers = #tpu.dot_dimension_numbers<[1], [0], [0], [1], [0, 0, 1, 1], [], []>} : vector<128x36xf32>, vector<36x128xf32>, vector<128x128xf32> -> vector<128x128xf32>
    %cst_9 = arith.constant 0.000000e+00 : f32
    %10 = vector.broadcast %cst_9 : f32 to vector<2x1x16x128xf32>
    %c0_10 = arith.constant 0 : index
    %c0_11 = arith.constant 0 : index
    %c0_12 = arith.constant 0 : index
    %c0_13 = arith.constant 0 : index
    %11 = vector.load %arg8[%c0_10, %c0_11, %c0_12, %c0_13] : memref<2x10x16x128xf32, #tpu.memory_space<vmem>>, vector<2x1x16x128xf32>
    tpu.vector_store %arg8[%c0_10, %c0_11, %c0_12, %c0_13], %10 {strides = array<i32>} : memref<2x10x16x128xf32, #tpu.memory_space<vmem>>, vector<2x1x16x128xf32>,
    %c0_14 = arith.constant 0 : index
    %c9 = arith.constant 9 : index
    %c0_15 = arith.constant 0 : index
    %c0_16 = arith.constant 0 : index
    %12 = vector.load %arg8[%c0_14, %c9, %c0_15, %c0_16] : memref<2x10x16x128xf32, #tpu.memory_space<vmem>>, vector<2x1x16x128xf32>
    tpu.vector_store %arg8[%c0_14, %c9, %c0_15, %c0_16], %10 {strides = array<i32>} : memref<2x10x16x128xf32, #tpu.memory_space<vmem>>, vector<2x1x16x128xf32>,
    %cst_17 = arith.constant 0.000000e+00 : f32
    %13 = vector.broadcast %cst_17 : f32 to vector<2x10x1x128xf32>
    %c0_18 = arith.constant 0 : index
    %c0_19 = arith.constant 0 : index
    %c0_20 = arith.constant 0 : index
    %c0_21 = arith.constant 0 : index
    %14 = vector.load %arg8[%c0_18, %c0_19, %c0_20, %c0_21] : memref<2x10x16x128xf32, #tpu.memory_space<vmem>>, vector<2x10x1x128xf32>
    tpu.vector_store %arg8[%c0_18, %c0_19, %c0_20, %c0_21], %13 {strides = array<i32>} : memref<2x10x16x128xf32, #tpu.memory_space<vmem>>, vector<2x10x1x128xf32>,
    %c0_22 = arith.constant 0 : index
    %c0_23 = arith.constant 0 : index
    %c9_24 = arith.constant 9 : index
    %c0_25 = arith.constant 0 : index
    %15 = vector.load %arg8[%c0_22, %c0_23, %c9_24, %c0_25] : memref<2x10x16x128xf32, #tpu.memory_space<vmem>>, vector<2x10x1x128xf32>
    tpu.vector_store %arg8[%c0_22, %c0_23, %c9_24, %c0_25], %13 {strides = array<i32>} : memref<2x10x16x128xf32, #tpu.memory_space<vmem>>, vector<2x10x1x128xf32>,
    %16 = vector.shape_cast %7 : vector<128x128xf32> to vector<2x8x8x128xf32>
    %c0_26 = arith.constant 0 : index
    %c1 = arith.constant 1 : index
    %c1_27 = arith.constant 1 : index
    %c0_28 = arith.constant 0 : index
    %17 = vector.load %arg8[%c0_26, %c1, %c1_27, %c0_28] : memref<2x10x16x128xf32, #tpu.memory_space<vmem>>, vector<2x8x8x128xf32>
    tpu.vector_store %arg8[%c0_26, %c1, %c1_27, %c0_28], %16 {strides = array<i32>} : memref<2x10x16x128xf32, #tpu.memory_space<vmem>>, vector<2x8x8x128xf32>,
    %c0_29 = arith.constant 0 : index
    %c0_30 = arith.constant 0 : index
    %18 = vector.load %arg6[%c0_29, %c0_30] : memref<1x128xf32, #tpu.memory_space<vmem>>, vector<1x128xf32>
    %19 = vector.broadcast %18 : vector<1x128xf32> to vector<128x128xf32>
    %20 = arith.addf %9, %19 : vector<128x128xf32>
    %c0_31 = arith.constant 0 : index
    %c0_32 = arith.constant 0 : index
    %c0_33 = arith.constant 0 : index
    %c0_34 = arith.constant 0 : index
    %21 = vector.load %arg8[%c0_31, %c0_32, %c0_33, %c0_34] : memref<2x10x16x128xf32, #tpu.memory_space<vmem>>, vector<2x8x8x128xf32>
    %22 = vector.shape_cast %21 : vector<2x8x8x128xf32> to vector<128x128xf32>
    %c0_35 = arith.constant 0 : index
    %c0_36 = arith.constant 0 : index
    %c0_37 = arith.constant 0 : index
    %23 = vector.load %arg5[%c0_35, %c0_36, %c0_37] : memref<9x128x128xf32, #tpu.memory_space<vmem>>, vector<1x128x128xf32>
    %24 = vector.shape_cast %23 : vector<1x128x128xf32> to vector<128x128xf32>
    %cst_38 = arith.constant dense<0.000000e+00> : vector<128x128xf32>
    %25 = tpu.matmul %22, %24, %cst_38 {dimension_numbers = #tpu.dot_dimension_numbers<[1], [0], [0], [1], [0, 0, 1, 1], [], []>} : vector<128x128xf32>, vector<128x128xf32>, vector<128x128xf32> -> vector<128x128xf32>
    %26 = arith.addf %20, %25 : vector<128x128xf32>
    %c0_39 = arith.constant 0 : index
    %c0_40 = arith.constant 0 : index
    %c1_41 = arith.constant 1 : index
    %c0_42 = arith.constant 0 : index
    %27 = vector.load %arg8[%c0_39, %c0_40, %c1_41, %c0_42] : memref<2x10x16x128xf32, #tpu.memory_space<vmem>>, vector<2x8x8x128xf32>
    %28 = vector.shape_cast %27 : vector<2x8x8x128xf32> to vector<128x128xf32>
    %c1_43 = arith.constant 1 : index
    %c0_44 = arith.constant 0 : index
    %c0_45 = arith.constant 0 : index
    %29 = vector.load %arg5[%c1_43, %c0_44, %c0_45] : memref<9x128x128xf32, #tpu.memory_space<vmem>>, vector<1x128x128xf32>
    %30 = vector.shape_cast %29 : vector<1x128x128xf32> to vector<128x128xf32>
    %cst_46 = arith.constant dense<0.000000e+00> : vector<128x128xf32>
    %31 = tpu.matmul %28, %30, %cst_46 {dimension_numbers = #tpu.dot_dimension_numbers<[1], [0], [0], [1], [0, 0, 1, 1], [], []>} : vector<128x128xf32>, vector<128x128xf32>, vector<128x128xf32> -> vector<128x128xf32>
    %32 = arith.addf %26, %31 : vector<128x128xf32>
    %c0_47 = arith.constant 0 : index
    %c0_48 = arith.constant 0 : index
    %c2 = arith.constant 2 : index
    %c0_49 = arith.constant 0 : index
    %33 = vector.load %arg8[%c0_47, %c0_48, %c2, %c0_49] : memref<2x10x16x128xf32, #tpu.memory_space<vmem>>, vector<2x8x8x128xf32>
    %34 = vector.shape_cast %33 : vector<2x8x8x128xf32> to vector<128x128xf32>
    %c2_50 = arith.constant 2 : index
    %c0_51 = arith.constant 0 : index
    %c0_52 = arith.constant 0 : index
    %35 = vector.load %arg5[%c2_50, %c0_51, %c0_52] : memref<9x128x128xf32, #tpu.memory_space<vmem>>, vector<1x128x128xf32>
    %36 = vector.shape_cast %35 : vector<1x128x128xf32> to vector<128x128xf32>
    %cst_53 = arith.constant dense<0.000000e+00> : vector<128x128xf32>
    %37 = tpu.matmul %34, %36, %cst_53 {dimension_numbers = #tpu.dot_dimension_numbers<[1], [0], [0], [1], [0, 0, 1, 1], [], []>} : vector<128x128xf32>, vector<128x128xf32>, vector<128x128xf32> -> vector<128x128xf32>
    %38 = arith.addf %32, %37 : vector<128x128xf32>
    %c0_54 = arith.constant 0 : index
    %c1_55 = arith.constant 1 : index
    %c0_56 = arith.constant 0 : index
    %c0_57 = arith.constant 0 : index
    %39 = vector.load %arg8[%c0_54, %c1_55, %c0_56, %c0_57] : memref<2x10x16x128xf32, #tpu.memory_space<vmem>>, vector<2x8x8x128xf32>
    %40 = vector.shape_cast %39 : vector<2x8x8x128xf32> to vector<128x128xf32>
    %c3 = arith.constant 3 : index
    %c0_58 = arith.constant 0 : index
    %c0_59 = arith.constant 0 : index
    %41 = vector.load %arg5[%c3, %c0_58, %c0_59] : memref<9x128x128xf32, #tpu.memory_space<vmem>>, vector<1x128x128xf32>
    %42 = vector.shape_cast %41 : vector<1x128x128xf32> to vector<128x128xf32>
    %cst_60 = arith.constant dense<0.000000e+00> : vector<128x128xf32>
    %43 = tpu.matmul %40, %42, %cst_60 {dimension_numbers = #tpu.dot_dimension_numbers<[1], [0], [0], [1], [0, 0, 1, 1], [], []>} : vector<128x128xf32>, vector<128x128xf32>, vector<128x128xf32> -> vector<128x128xf32>
    %44 = arith.addf %38, %43 : vector<128x128xf32>
    %c0_61 = arith.constant 0 : index
    %c1_62 = arith.constant 1 : index
    %c1_63 = arith.constant 1 : index
    %c0_64 = arith.constant 0 : index
    %45 = vector.load %arg8[%c0_61, %c1_62, %c1_63, %c0_64] : memref<2x10x16x128xf32, #tpu.memory_space<vmem>>, vector<2x8x8x128xf32>
    %46 = vector.shape_cast %45 : vector<2x8x8x128xf32> to vector<128x128xf32>
    %c4 = arith.constant 4 : index
    %c0_65 = arith.constant 0 : index
    %c0_66 = arith.constant 0 : index
    %47 = vector.load %arg5[%c4, %c0_65, %c0_66] : memref<9x128x128xf32, #tpu.memory_space<vmem>>, vector<1x128x128xf32>
    %48 = vector.shape_cast %47 : vector<1x128x128xf32> to vector<128x128xf32>
    %cst_67 = arith.constant dense<0.000000e+00> : vector<128x128xf32>
    %49 = tpu.matmul %46, %48, %cst_67 {dimension_numbers = #tpu.dot_dimension_numbers<[1], [0], [0], [1], [0, 0, 1, 1], [], []>} : vector<128x128xf32>, vector<128x128xf32>, vector<128x128xf32> -> vector<128x128xf32>
    %50 = arith.addf %44, %49 : vector<128x128xf32>
    %c0_68 = arith.constant 0 : index
    %c1_69 = arith.constant 1 : index
    %c2_70 = arith.constant 2 : index
    %c0_71 = arith.constant 0 : index
    %51 = vector.load %arg8[%c0_68, %c1_69, %c2_70, %c0_71] : memref<2x10x16x128xf32, #tpu.memory_space<vmem>>, vector<2x8x8x128xf32>
    %52 = vector.shape_cast %51 : vector<2x8x8x128xf32> to vector<128x128xf32>
    %c5 = arith.constant 5 : index
    %c0_72 = arith.constant 0 : index
    %c0_73 = arith.constant 0 : index
    %53 = vector.load %arg5[%c5, %c0_72, %c0_73] : memref<9x128x128xf32, #tpu.memory_space<vmem>>, vector<1x128x128xf32>
    %54 = vector.shape_cast %53 : vector<1x128x128xf32> to vector<128x128xf32>
    %cst_74 = arith.constant dense<0.000000e+00> : vector<128x128xf32>
    %55 = tpu.matmul %52, %54, %cst_74 {dimension_numbers = #tpu.dot_dimension_numbers<[1], [0], [0], [1], [0, 0, 1, 1], [], []>} : vector<128x128xf32>, vector<128x128xf32>, vector<128x128xf32> -> vector<128x128xf32>
    %56 = arith.addf %50, %55 : vector<128x128xf32>
    %c0_75 = arith.constant 0 : index
    %c2_76 = arith.constant 2 : index
    %c0_77 = arith.constant 0 : index
    %c0_78 = arith.constant 0 : index
    %57 = vector.load %arg8[%c0_75, %c2_76, %c0_77, %c0_78] : memref<2x10x16x128xf32, #tpu.memory_space<vmem>>, vector<2x8x8x128xf32>
    %58 = vector.shape_cast %57 : vector<2x8x8x128xf32> to vector<128x128xf32>
    %c6 = arith.constant 6 : index
    %c0_79 = arith.constant 0 : index
    %c0_80 = arith.constant 0 : index
    %59 = vector.load %arg5[%c6, %c0_79, %c0_80] : memref<9x128x128xf32, #tpu.memory_space<vmem>>, vector<1x128x128xf32>
    %60 = vector.shape_cast %59 : vector<1x128x128xf32> to vector<128x128xf32>
    %cst_81 = arith.constant dense<0.000000e+00> : vector<128x128xf32>
    %61 = tpu.matmul %58, %60, %cst_81 {dimension_numbers = #tpu.dot_dimension_numbers<[1], [0], [0], [1], [0, 0, 1, 1], [], []>} : vector<128x128xf32>, vector<128x128xf32>, vector<128x128xf32> -> vector<128x128xf32>
    %62 = arith.addf %56, %61 : vector<128x128xf32>
    %c0_82 = arith.constant 0 : index
    %c2_83 = arith.constant 2 : index
    %c1_84 = arith.constant 1 : index
    %c0_85 = arith.constant 0 : index
    %63 = vector.load %arg8[%c0_82, %c2_83, %c1_84, %c0_85] : memref<2x10x16x128xf32, #tpu.memory_space<vmem>>, vector<2x8x8x128xf32>
    %64 = vector.shape_cast %63 : vector<2x8x8x128xf32> to vector<128x128xf32>
    %c7 = arith.constant 7 : index
    %c0_86 = arith.constant 0 : index
    %c0_87 = arith.constant 0 : index
    %65 = vector.load %arg5[%c7, %c0_86, %c0_87] : memref<9x128x128xf32, #tpu.memory_space<vmem>>, vector<1x128x128xf32>
    %66 = vector.shape_cast %65 : vector<1x128x128xf32> to vector<128x128xf32>
    %cst_88 = arith.constant dense<0.000000e+00> : vector<128x128xf32>
    %67 = tpu.matmul %64, %66, %cst_88 {dimension_numbers = #tpu.dot_dimension_numbers<[1], [0], [0], [1], [0, 0, 1, 1], [], []>} : vector<128x128xf32>, vector<128x128xf32>, vector<128x128xf32> -> vector<128x128xf32>
    %68 = arith.addf %62, %67 : vector<128x128xf32>
    %c0_89 = arith.constant 0 : index
    %c2_90 = arith.constant 2 : index
    %c2_91 = arith.constant 2 : index
    %c0_92 = arith.constant 0 : index
    %69 = vector.load %arg8[%c0_89, %c2_90, %c2_91, %c0_92] : memref<2x10x16x128xf32, #tpu.memory_space<vmem>>, vector<2x8x8x128xf32>
    %70 = vector.shape_cast %69 : vector<2x8x8x128xf32> to vector<128x128xf32>
    %c8 = arith.constant 8 : index
    %c0_93 = arith.constant 0 : index
    %c0_94 = arith.constant 0 : index
    %71 = vector.load %arg5[%c8, %c0_93, %c0_94] : memref<9x128x128xf32, #tpu.memory_space<vmem>>, vector<1x128x128xf32>
    %72 = vector.shape_cast %71 : vector<1x128x128xf32> to vector<128x128xf32>
    %cst_95 = arith.constant dense<0.000000e+00> : vector<128x128xf32>
    %73 = tpu.matmul %70, %72, %cst_95 {dimension_numbers = #tpu.dot_dimension_numbers<[1], [0], [0], [1], [0, 0, 1, 1], [], []>} : vector<128x128xf32>, vector<128x128xf32>, vector<128x128xf32> -> vector<128x128xf32>
    %74 = arith.addf %68, %73 : vector<128x128xf32>
    %cst_96 = arith.constant 0.000000e+00 : f32
    %75 = vector.broadcast %cst_96 : f32 to vector<128x128xf32>
    %76 = arith.maximumf %74, %75 : vector<128x128xf32>
    %c0_97 = arith.constant 0 : index
    %c0_98 = arith.constant 0 : index
    %77 = vector.load %arg7[%c0_97, %c0_98] : memref<128x128xf32, #tpu.memory_space<vmem>>, vector<128x128xf32>
    tpu.vector_store %arg7[%c0_97, %c0_98], %76 {strides = array<i32>} : memref<128x128xf32, #tpu.memory_space<vmem>>, vector<128x128xf32>,
    return
  }
  func.func @transform_0(%arg0: i32) -> (i32, i32) {
    %c0_i32 = arith.constant 0 : i32
    %c0_i32_0 = arith.constant 0 : i32
    return %arg0, %c0_i32 : i32, i32
  }
  func.func @transform_1(%arg0: i32) -> (i32, i32) {
    %c0_i32 = arith.constant 0 : i32
    %c0_i32_0 = arith.constant 0 : i32
    %c0_i32_1 = arith.constant 0 : i32
    return %c0_i32, %c0_i32_0 : i32, i32
  }
  func.func @transform_2(%arg0: i32) -> (i32, i32) {
    %c0_i32 = arith.constant 0 : i32
    %c0_i32_0 = arith.constant 0 : i32
    %c0_i32_1 = arith.constant 0 : i32
    return %c0_i32, %c0_i32_0 : i32, i32
  }
  func.func @transform_3(%arg0: i32) -> (i32, i32) {
    %c0_i32 = arith.constant 0 : i32
    %c0_i32_0 = arith.constant 0 : i32
    %c0_i32_1 = arith.constant 0 : i32
    return %c0_i32, %c0_i32_0 : i32, i32
  }
  func.func @transform_4(%arg0: i32) -> (i32, i32, i32) {
    %c0_i32 = arith.constant 0 : i32
    %c0_i32_0 = arith.constant 0 : i32
    %c0_i32_1 = arith.constant 0 : i32
    %c0_i32_2 = arith.constant 0 : i32
    return %c0_i32, %c0_i32_0, %c0_i32_1 : i32, i32, i32
  }
  func.func @transform_5(%arg0: i32) -> (i32, i32) {
    %c0_i32 = arith.constant 0 : i32
    %c0_i32_0 = arith.constant 0 : i32
    %c0_i32_1 = arith.constant 0 : i32
    return %c0_i32, %c0_i32_0 : i32, i32
  }
  func.func @transform_6(%arg0: i32) -> (i32, i32) {
    %c0_i32 = arith.constant 0 : i32
    %c0_i32_0 = arith.constant 0 : i32
    return %arg0, %c0_i32 : i32, i32
  }
}

</mosaic_0001>

<llo_original>
// kernel: basic_block_forward.1
$region0: #{basic_block_forward.1}
  #allocation0 [shape = 'u32[]', space=smem, size = 0x4, offset = 0x4, fixed_abs, tag = 'smem constant byte address 0x4 - core index']
  #allocation1 [shape = 'u32[144,128]{1,0:T(1,128)}', space=vmem, size = 0x12000, scoped, tag = 'internal scratch']
  #allocation2 [shape = 'f32[2,10,16,128]{3,2,1,0:T(8,128)}', space=vmem, size = 0x28000, scoped, tag = 'scratch operand']
  %s0 = inlined_call_operand.vmem [shape: f32[128,36], index: 0, kind: input, shape index: {}]
  %s1 = inlined_call_operand.vmem [shape: f32[36,128], index: 1, kind: input, shape index: {}]
  %s2 = inlined_call_operand.vmem [shape: f32[1,128], index: 2, kind: input, shape index: {}]
  %s3 = inlined_call_operand.vmem [shape: f32[36,128], index: 3, kind: input, shape index: {}]
  %s4 = inlined_call_operand.vmem [shape: f32[9,128,128], index: 4, kind: input, shape index: {}]
  %s5 = inlined_call_operand.vmem [shape: f32[1,128], index: 5, kind: input, shape index: {}]
  %s6 = inlined_call_operand.vmem [shape: f32[128,128], index: 6, kind: output, shape index: {}]
  %s7 = sld [smem:[#allocation0]]
  $region34: #{basic_block_forward.1} parent=0
    _
  %s9 = ssub.s32 1, %s7
  %s10 = scalar_select 0, %s9, %s7
  // Predicated region
  $region2: #{basic_block_forward.1} parent=0 // pred_check
    _
  $region3: #{basic_block_forward.1} parent=0 // pred_check_branch
    %12 = sbr.rel (0) target = $region5
  $region4: #{basic_block_forward.1} parent=0 // pred_region
    _
  $region5: #{basic_block_forward.1} parent=0 // pred_fallthru
    _
  // Predicated region
  $region6: #{basic_block_forward.1} parent=0 // pred_check
    _
  $region7: #{basic_block_forward.1} parent=0 // pred_check_branch
    %14 = sbr.rel (0) target = $region9
  $region8: #{basic_block_forward.1} parent=0 // pred_region
    _
  $region9: #{basic_block_forward.1} parent=0 // pred_fallthru
    _
  // Predicated region
  $region10: #{basic_block_forward.1} parent=0 // pred_check
    _
  $region11: #{basic_block_forward.1} parent=0 // pred_check_branch
    %16 = sbr.rel (0) target = $region13
  $region12: #{basic_block_forward.1} parent=0 // pred_region
    _
  $region13: #{basic_block_forward.1} parent=0 // pred_fallthru
    _
  // Predicated region
  $region14: #{basic_block_forward.1} parent=0 // pred_check
    _
  $region15: #{basic_block_forward.1} parent=0 // pred_check_branch
    %18 = sbr.rel (0) target = $region17
  $region16: #{basic_block_forward.1} parent=0 // pred_region
    _
  $region17: #{basic_block_forward.1} parent=0 // pred_fallthru
    _
  // Predicated region
  $region18: #{basic_block_forward.1} parent=0 // pred_check
    _
  $region19: #{basic_block_forward.1} parent=0 // pred_check_branch
    %20 = sbr.rel (0) target = $region21
  $region20: #{basic_block_forward.1} parent=0 // pred_region
    _
  $region21: #{basic_block_forward.1} parent=0 // pred_fallthru
    _
  // Predicated region
  $region22: #{basic_block_forward.1} parent=0 // pred_check
    _
  $region23: #{basic_block_forward.1} parent=0 // pred_check_branch
    %22 = sbr.rel (0) target = $region25
  $region24: #{basic_block_forward.1} parent=0 // pred_region
    _
  $region25: #{basic_block_forward.1} parent=0 // pred_fallthru
    _
  %v23 = vld [vmem:[%s0] sm:$0xff]
  %v24 = vld [vmem:[%s0 + $0x8] sm:$0xff]
  %v25 = vld [vmem:[%s0 + $0x10] sm:$0xff]
  %v26 = vld [vmem:[%s0 + $0x18] sm:$0xff]
  %v27 = vld [vmem:[%s0 + $0x20] sm:$0xff]
  %v28 = vld [vmem:[%s0 + $0x28] sm:$0xff]
  %v29 = vld [vmem:[%s0 + $0x30] sm:$0xff]
  %v30 = vld [vmem:[%s0 + $0x38] sm:$0xff]
  %v31 = vld [vmem:[%s0 + $0x40] sm:$0xff]
  %v32 = vld [vmem:[%s0 + $0x48] sm:$0xff]
  %v33 = vld [vmem:[%s0 + $0x50] sm:$0xff]
  %v34 = vld [vmem:[%s0 + $0x58] sm:$0xff]
  %v35 = vld [vmem:[%s0 + $0x60] sm:$0xff]
  %v36 = vld [vmem:[%s0 + $0x68] sm:$0xff]
  %v37 = vld [vmem:[%s0 + $0x70] sm:$0xff]
  %v38 = vld [vmem:[%s0 + $0x78] sm:$0xff]
  %v39 = vld [vmem:[%s1] sm:$0xff]
  %v40 = vld [vmem:[%s1 + $0x8] sm:$0xff]
  %v41 = vld [vmem:[%s1 + $0x10] sm:$0xff]
  %v42 = vld [vmem:[%s1 + $0x18] sm:$0xff]
  %v43 = vld [vmem:[%s1 + $0x20] sm:$0xf]
  %v44 = vld [vmem:[%s2] sm:$0x1]
  %v46 = vlaneseq
  %v47 = vshrl.u32 %v46, 7
  %v48 = vsub.s32 0, %v47
  %v49 = vrot.slane %v44, %v48
  %vm51 = vcmask 293888
  %v53 = vsel %vm51, %v23, 0
  %v56 = vsel %vm51, %v24, 0
  %v59 = vsel %vm51, %v25, 0
  %v62 = vsel %vm51, %v26, 0
  %v65 = vsel %vm51, %v27, 0
  %v68 = vsel %vm51, %v28, 0
  %v71 = vsel %vm51, %v29, 0
  %v74 = vsel %vm51, %v30, 0
  %v77 = vsel %vm51, %v31, 0
  %v80 = vsel %vm51, %v32, 0
  %v83 = vsel %vm51, %v33, 0
  %v86 = vsel %vm51, %v34, 0
  %v89 = vsel %vm51, %v35, 0
  %v92 = vsel %vm51, %v36, 0
  %v95 = vsel %vm51, %v37, 0
  %v98 = vsel %vm51, %v38, 0
  %vm100 = vcmask 1043456
  %v102 = vsel %vm100, %v43, 0
  %104 = vmatprep.subr.mxu0 0.0
  %105 = vmatpush1.msra.mxu0 %v39
  %106 = vmatprep.subr.mxu0 0.0
  %107 = vmatpush1.msra.mxu0 %v40
  %108 = vmatprep.subr.mxu0 0.0
  %109 = vmatpush1.msra.mxu0 %v41
  %110 = vmatprep.subr.mxu0 0.0
  %111 = vmatpush1.msra.mxu0 %v42
  %112 = vmatprep.subr.mxu0 0.0
  %113 = vmatpush1.msra.mxu0 %v102
  %114 = vmatprep.subr.mxu0 0.0
  %115 = vmatpush1.msra.mxu0 0.0
  %116 = vmatprep.subr.mxu0 0.0
  %117 = vmatpush1.msra.mxu0 0.0
  %118 = vmatprep.subr.mxu0 0.0
  %119 = vmatpush1.msra.mxu0 0.0
  %120 = vmatprep.subr.mxu0 0.0
  %121 = vmatpush1.msra.mxu0 0.0
  %122 = vmatprep.subr.mxu0 0.0
  %123 = vmatpush1.msra.mxu0 0.0
  %124 = vmatprep.subr.mxu0 0.0
  %125 = vmatpush1.msra.mxu0 0.0
  %126 = vmatprep.subr.mxu0 0.0
  %127 = vmatpush1.msra.mxu0 0.0
  %128 = vmatprep.subr.mxu0 0.0
  %129 = vmatpush1.msra.mxu0 0.0
  %130 = vmatprep.subr.mxu0 0.0
  %131 = vmatpush1.msra.mxu0 0.0
  %132 = vmatprep.subr.mxu0 0.0
  %133 = vmatpush1.msra.mxu0 0.0
  %134 = vmatprep.subr.mxu0 0.0
  %135 = vmatpush1.msra.mxu0 0.0
  %136 = vmatprep.subr.mxu0 0.0
  %137 = vmatpush1.msra.mxu0 0.0
  %138 = vmatprep.subr.mxu0 0.0
  %139 = vmatpush1.msra.mxu0 0.0
  %140 = vmatprep.subr.mxu0 0.0
  %141 = vmatpush1.msra.mxu0 0.0
  %142 = vmatprep.subr.mxu0 0.0
  %143 = vmatpush1.msra.mxu0 0.0
  %144 = vmatprep.subr.mxu0 0.0
  %145 = vmatpush1.msra.mxu0 0.0
  %146 = vmatprep.subr.mxu0 0.0
  %147 = vmatpush1.msra.mxu0 0.0
  %148 = vmatprep.subr.mxu0 0.0
  %149 = vmatpush1.msra.mxu0 0.0
  %150 = vmatprep.subr.mxu0 0.0
  %151 = vmatpush1.msra.mxu0 0.0
  %152 = vmatprep.subr.mxu0 0.0
  %153 = vmatpush1.msra.mxu0 0.0
  %154 = vmatprep.subr.mxu0 0.0
  %155 = vmatpush1.msra.mxu0 0.0
  %156 = vmatprep.subr.mxu0 0.0
  %157 = vmatpush1.msra.mxu0 0.0
  %158 = vmatprep.subr.mxu0 0.0
  %159 = vmatpush1.msra.mxu0 0.0
  %160 = vmatprep.subr.mxu0 0.0
  %161 = vmatpush1.msra.mxu0 0.0
  %162 = vmatprep.subr.mxu0 0.0
  %163 = vmatpush1.msra.mxu0 0.0
  %164 = vmatprep.subr.mxu0 0.0
  %165 = vmatpush1.msra.mxu0 0.0
  %166 = vmatprep.subr.mxu0 0.0
  %167 = vmatpush1.msra.mxu0 0.0
  %168 = vmatprep.mubr.f32.mxu0 0.0
  %169 = vmatmul.mubr.f32.gmra.mrb[0].mxu0 %v53
  %v170 = vpop.f32.mrb[0].mxu0
  %v171 = vadd.f32 %v49, %v170
  %v172 = vpop.f32.mrb[0].mxu0
  %173 = vmatprep.mubr.f32.mxu0 0.0
  %174 = vmatmul.mubr.f32.gmra.mrb[0].mxu0 %v56
  %v175 = vpop.f32.mrb[0].mxu0
  %v176 = vadd.f32 %v49, %v175
  %v177 = vpop.f32.mrb[0].mxu0
  %178 = vmatprep.mubr.f32.mxu0 0.0
  %179 = vmatmul.mubr.f32.gmra.mrb[0].mxu0 %v59
  %v180 = vpop.f32.mrb[0].mxu0
  %v181 = vadd.f32 %v49, %v180
  %v182 = vpop.f32.mrb[0].mxu0
  %183 = vmatprep.mubr.f32.mxu0 0.0
  %184 = vmatmul.mubr.f32.gmra.mrb[0].mxu0 %v62
  %v185 = vpop.f32.mrb[0].mxu0
  %v186 = vadd.f32 %v49, %v185
  %v187 = vpop.f32.mrb[0].mxu0
  %188 = vmatprep.mubr.f32.mxu0 0.0
  %189 = vmatmul.mubr.f32.gmra.mrb[0].mxu0 %v65
  %v190 = vpop.f32.mrb[0].mxu0
  %v191 = vadd.f32 %v49, %v190
  %v192 = vpop.f32.mrb[0].mxu0
  %193 = vmatprep.mubr.f32.mxu0 0.0
  %194 = vmatmul.mubr.f32.gmra.mrb[0].mxu0 %v68
  %v195 = vpop.f32.mrb[0].mxu0
  %v196 = vadd.f32 %v49, %v195
  %v197 = vpop.f32.mrb[0].mxu0
  %198 = vmatprep.mubr.f32.mxu0 0.0
  %199 = vmatmul.mubr.f32.gmra.mrb[0].mxu0 %v71
  %v200 = vpop.f32.mrb[0].mxu0
  %v201 = vadd.f32 %v49, %v200
  %v202 = vpop.f32.mrb[0].mxu0
  %203 = vmatprep.mubr.f32.mxu0 0.0
  %204 = vmatmul.mubr.f32.gmra.mrb[0].mxu0 %v74
  %v205 = vpop.f32.mrb[0].mxu0
  %v206 = vadd.f32 %v49, %v205
  %v207 = vpop.f32.mrb[0].mxu0
  %208 = vmatprep.mubr.f32.mxu0 0.0
  %209 = vmatmul.mubr.f32.gmra.mrb[0].mxu0 %v77
  %v210 = vpop.f32.mrb[0].mxu0
  %v211 = vadd.f32 %v49, %v210
  %v212 = vpop.f32.mrb[0].mxu0
  %213 = vmatprep.mubr.f32.mxu0 0.0
  %214 = vmatmul.mubr.f32.gmra.mrb[0].mxu0 %v80
  %v215 = vpop.f32.mrb[0].mxu0
  %v216 = vadd.f32 %v49, %v215
  %v217 = vpop.f32.mrb[0].mxu0
  %218 = vmatprep.mubr.f32.mxu0 0.0
  %219 = vmatmul.mubr.f32.gmra.mrb[0].mxu0 %v83
  %v220 = vpop.f32.mrb[0].mxu0
  %v221 = vadd.f32 %v49, %v220
  %v222 = vpop.f32.mrb[0].mxu0
  %223 = vmatprep.mubr.f32.mxu0 0.0
  %224 = vmatmul.mubr.f32.gmra.mrb[0].mxu0 %v86
  %v225 = vpop.f32.mrb[0].mxu0
  %v226 = vadd.f32 %v49, %v225
  %v227 = vpop.f32.mrb[0].mxu0
  %228 = vmatprep.mubr.f32.mxu0 0.0
  %229 = vmatmul.mubr.f32.gmra.mrb[0].mxu0 %v89
  %v230 = vpop.f32.mrb[0].mxu0
  %v231 = vadd.f32 %v49, %v230
  %v232 = vpop.f32.mrb[0].mxu0
  %233 = vmatprep.mubr.f32.mxu0 0.0
  %234 = vmatmul.mubr.f32.gmra.mrb[0].mxu0 %v92
  %v235 = vpop.f32.mrb[0].mxu0
  %v236 = vadd.f32 %v49, %v235
  %v237 = vpop.f32.mrb[0].mxu0
  %238 = vmatprep.mubr.f32.mxu0 0.0
  %239 = vmatmul.mubr.f32.gmra.mrb[0].mxu0 %v95
  %v240 = vpop.f32.mrb[0].mxu0
  %v241 = vadd.f32 %v49, %v240
  %v242 = vpop.f32.mrb[0].mxu0
  %243 = vmatprep.mubr.f32.mxu0 0.0
  %244 = vmatmul.mubr.f32.gmra.mrb[0].mxu0 %v98
  %v245 = vpop.f32.mrb[0].mxu0
  %v246 = vadd.f32 %v49, %v245
  %v247 = vpop.f32.mrb[0].mxu0
  %248 = vdwg.mxu0
  %v249 = vmax.f32 %v171, 0.0
  %v250 = vmax.f32 %v176, 0.0
  %v251 = vmax.f32 %v181, 0.0
  %v252 = vmax.f32 %v186, 0.0
  %v253 = vmax.f32 %v191, 0.0
  %v254 = vmax.f32 %v196, 0.0
  %v255 = vmax.f32 %v201, 0.0
  %v256 = vmax.f32 %v206, 0.0
  %v257 = vmax.f32 %v211, 0.0
  %v258 = vmax.f32 %v216, 0.0
  %v259 = vmax.f32 %v221, 0.0
  %v260 = vmax.f32 %v226, 0.0
  %v261 = vmax.f32 %v231, 0.0
  %v262 = vmax.f32 %v236, 0.0
  %v263 = vmax.f32 %v241, 0.0
  %v264 = vmax.f32 %v246, 0.0
  %v265 = vld [vmem:[%s3] sm:$0xff]
  %v266 = vld [vmem:[%s3 + $0x8] sm:$0xff]
  %v267 = vld [vmem:[%s3 + $0x10] sm:$0xff]
  %v268 = vld [vmem:[%s3 + $0x18] sm:$0xff]
  %v269 = vld [vmem:[%s3 + $0x20] sm:$0xf]
  %270 = vst [vmem:[#allocation2] sm:$0xff] 0.0
  %271 = vst [vmem:[#allocation2 + $0x8] sm:$0xff] 0.0
  %272 = vst [vmem:[#allocation2 + $0xa0] sm:$0xff] 0.0
  %273 = vst [vmem:[#allocation2 + $0xa8] sm:$0xff] 0.0
  %s274 = scalar_lea.vmem [#allocation2], 144
  %275 = vst [vmem:[%s274] sm:$0xff] 0.0
  %276 = vst [vmem:[%s274 + $0x8] sm:$0xff] 0.0
  %277 = vst [vmem:[%s274 + $0xa0] sm:$0xff] 0.0
  %278 = vst [vmem:[%s274 + $0xa8] sm:$0xff] 0.0
  %279 = vst [vmem:[#allocation2] sm:$0x1] 0.0
  %280 = vst [vmem:[#allocation2 + $0x10] sm:$0x1] 0.0
  %281 = vst [vmem:[#allocation2 + $0x20] sm:$0x1] 0.0
  %282 = vst [vmem:[#allocation2 + $0x30] sm:$0x1] 0.0
  %283 = vst [vmem:[#allocation2 + $0x40] sm:$0x1] 0.0
  %284 = vst [vmem:[#allocation2 + $0x50] sm:$0x1] 0.0
  %285 = vst [vmem:[#allocation2 + $0x60] sm:$0x1] 0.0
  %286 = vst [vmem:[#allocation2 + $0x70] sm:$0x1] 0.0
  %287 = vst [vmem:[#allocation2 + $0x80] sm:$0x1] 0.0
  %288 = vst [vmem:[#allocation2 + $0x90] sm:$0x1] 0.0
  %289 = vst [vmem:[#allocation2 + $0xa0] sm:$0x1] 0.0
  %290 = vst [vmem:[#allocation2 + $0xb0] sm:$0x1] 0.0
  %291 = vst [vmem:[#allocation2 + $0xc0] sm:$0x1] 0.0
  %292 = vst [vmem:[#allocation2 + $0xd0] sm:$0x1] 0.0
  %293 = vst [vmem:[#allocation2 + $0xe0] sm:$0x1] 0.0
  %294 = vst [vmem:[#allocation2 + $0xf0] sm:$0x1] 0.0
  %295 = vst [vmem:[#allocation2 + $0x100] sm:$0x1] 0.0
  %296 = vst [vmem:[#allocation2 + $0x110] sm:$0x1] 0.0
  %297 = vst [vmem:[#allocation2 + $0x120] sm:$0x1] 0.0
  %298 = vst [vmem:[#allocation2 + $0x130] sm:$0x1] 0.0
  %299 = vst [vmem:[#allocation2 + $0x9] sm:$0x1] 0.0
  %300 = vst [vmem:[#allocation2 + $0x19] sm:$0x1] 0.0
  %301 = vst [vmem:[#allocation2 + $0x29] sm:$0x1] 0.0
  %302 = vst [vmem:[#allocation2 + $0x39] sm:$0x1] 0.0
  %303 = vst [vmem:[#allocation2 + $0x49] sm:$0x1] 0.0
  %304 = vst [vmem:[#allocation2 + $0x59] sm:$0x1] 0.0
  %305 = vst [vmem:[#allocation2 + $0x69] sm:$0x1] 0.0
  %306 = vst [vmem:[#allocation2 + $0x79] sm:$0x1] 0.0
  %307 = vst [vmem:[#allocation2 + $0x89] sm:$0x1] 0.0
  %308 = vst [vmem:[#allocation2 + $0x99] sm:$0x1] 0.0
  %309 = vst [vmem:[#allocation2 + $0xa9] sm:$0x1] 0.0
  %310 = vst [vmem:[#allocation2 + $0xb9] sm:$0x1] 0.0
  %311 = vst [vmem:[#allocation2 + $0xc9] sm:$0x1] 0.0
  %312 = vst [vmem:[#allocation2 + $0xd9] sm:$0x1] 0.0
  %313 = vst [vmem:[#allocation2 + $0xe9] sm:$0x1] 0.0
  %314 = vst [vmem:[#allocation2 + $0xf9] sm:$0x1] 0.0
  %315 = vst [vmem:[#allocation2 + $0x109] sm:$0x1] 0.0
  %316 = vst [vmem:[#allocation2 + $0x119] sm:$0x1] 0.0
  %317 = vst [vmem:[#allocation2 + $0x129] sm:$0x1] 0.0
  %318 = vst [vmem:[#allocation2 + $0x139] sm:$0x1] 0.0
  %s319 = scalar_lea.vmem [#allocation2], 16
  %320 = vst [vmem:[%s319 + $0x1] sm:$0xff] %v249
  %321 = vst [vmem:[%s319 + $0x11] sm:$0xff] %v250
  %322 = vst [vmem:[%s319 + $0x21] sm:$0xff] %v251
  %323 = vst [vmem:[%s319 + $0x31] sm:$0xff] %v252
  %324 = vst [vmem:[%s319 + $0x41] sm:$0xff] %v253
  %325 = vst [vmem:[%s319 + $0x51] sm:$0xff] %v254
  %326 = vst [vmem:[%s319 + $0x61] sm:$0xff] %v255
  %327 = vst [vmem:[%s319 + $0x71] sm:$0xff] %v256
  %328 = vst [vmem:[%s319 + $0xa1] sm:$0xff] %v257
  %329 = vst [vmem:[%s319 + $0xb1] sm:$0xff] %v258
  %330 = vst [vmem:[%s319 + $0xc1] sm:$0xff] %v259
  %331 = vst [vmem:[%s319 + $0xd1] sm:$0xff] %v260
  %332 = vst [vmem:[%s319 + $0xe1] sm:$0xff] %v261
  %333 = vst [vmem:[%s319 + $0xf1] sm:$0xff] %v262
  %334 = vst [vmem:[%s319 + $0x101] sm:$0xff] %v263
  %335 = vst [vmem:[%s319 + $0x111] sm:$0xff] %v264
  %v336 = vld [vmem:[%s5] sm:$0x1]
  %v338 = vlaneseq
  %v339 = vshrl.u32 %v338, 7
  %v340 = vsub.s32 0, %v339
  %v341 = vrot.slane %v336, %v340
  %v344 = vsel %vm100, %v269, 0
  %346 = vmatprep.subr.mxu0 0.0
  %347 = vmatpush1.msra.mxu0 %v265
  %348 = vmatprep.subr.mxu0 0.0
  %349 = vmatpush1.msra.mxu0 %v266
  %350 = vmatprep.subr.mxu0 0.0
  %351 = vmatpush1.msra.mxu0 %v267
  %352 = vmatprep.subr.mxu0 0.0
  %353 = vmatpush1.msra.mxu0 %v268
  %354 = vmatprep.subr.mxu0 0.0
  %355 = vmatpush1.msra.mxu0 %v344
  %356 = vmatprep.subr.mxu0 0.0
  %357 = vmatpush1.msra.mxu0 0.0
  %358 = vmatprep.subr.mxu0 0.0
  %359 = vmatpush1.msra.mxu0 0.0
  %360 = vmatprep.subr.mxu0 0.0
  %361 = vmatpush1.msra.mxu0 0.0
  %362 = vmatprep.subr.mxu0 0.0
  %363 = vmatpush1.msra.mxu0 0.0
  %364 = vmatprep.subr.mxu0 0.0
  %365 = vmatpush1.msra.mxu0 0.0
  %366 = vmatprep.subr.mxu0 0.0
  %367 = vmatpush1.msra.mxu0 0.0
  %368 = vmatprep.subr.mxu0 0.0
  %369 = vmatpush1.msra.mxu0 0.0
  %370 = vmatprep.subr.mxu0 0.0
  %371 = vmatpush1.msra.mxu0 0.0
  %372 = vmatprep.subr.mxu0 0.0
  %373 = vmatpush1.msra.mxu0 0.0
  %374 = vmatprep.subr.mxu0 0.0
  %375 = vmatpush1.msra.mxu0 0.0
  %376 = vmatprep.subr.mxu0 0.0
  %377 = vmatpush1.msra.mxu0 0.0
  %378 = vmatprep.subr.mxu0 0.0
  %379 = vmatpush1.msra.mxu0 0.0
  %380 = vmatprep.subr.mxu0 0.0
  %381 = vmatpush1.msra.mxu0 0.0
  %382 = vmatprep.subr.mxu0 0.0
  %383 = vmatpush1.msra.mxu0 0.0
  %384 = vmatprep.subr.mxu0 0.0
  %385 = vmatpush1.msra.mxu0 0.0
  %386 = vmatprep.subr.mxu0 0.0
  %387 = vmatpush1.msra.mxu0 0.0
  %388 = vmatprep.subr.mxu0 0.0
  %389 = vmatpush1.msra.mxu0 0.0
  %390 = vmatprep.subr.mxu0 0.0
  %391 = vmatpush1.msra.mxu0 0.0
  %392 = vmatprep.subr.mxu0 0.0
  %393 = vmatpush1.msra.mxu0 0.0
  %394 = vmatprep.subr.mxu0 0.0
  %395 = vmatpush1.msra.mxu0 0.0
  %396 = vmatprep.subr.mxu0 0.0
  %397 = vmatpush1.msra.mxu0 0.0
  %398 = vmatprep.subr.mxu0 0.0
  %399 = vmatpush1.msra.mxu0 0.0
  %400 = vmatprep.subr.mxu0 0.0
  %401 = vmatpush1.msra.mxu0 0.0
  %402 = vmatprep.subr.mxu0 0.0
  %403 = vmatpush1.msra.mxu0 0.0
  %404 = vmatprep.subr.mxu0 0.0
  %405 = vmatpush1.msra.mxu0 0.0
  %406 = vmatprep.subr.mxu0 0.0
  %407 = vmatpush1.msra.mxu0 0.0
  %408 = vmatprep.subr.mxu0 0.0
  %409 = vmatpush1.msra.mxu0 0.0
  %410 = vmatprep.mubr.f32.mxu0 0.0
  %411 = vmatmul.mubr.f32.gmra.mrb[0].mxu0 %v53
  %v412 = vpop.f32.mrb[0].mxu0
  %v413 = vadd.f32 %v341, %v412
  %v414 = vpop.f32.mrb[0].mxu0
  %415 = vmatprep.mubr.f32.mxu0 0.0
  %416 = vmatmul.mubr.f32.gmra.mrb[0].mxu0 %v56
  %v417 = vpop.f32.mrb[0].mxu0
  %v418 = vadd.f32 %v341, %v417
  %v419 = vpop.f32.mrb[0].mxu0
  %420 = vmatprep.mubr.f32.mxu0 0.0
  %421 = vmatmul.mubr.f32.gmra.mrb[0].mxu0 %v59
  %v422 = vpop.f32.mrb[0].mxu0
  %v423 = vadd.f32 %v341, %v422
  %v424 = vpop.f32.mrb[0].mxu0
  %425 = vmatprep.mubr.f32.mxu0 0.0
  %426 = vmatmul.mubr.f32.gmra.mrb[0].mxu0 %v62
  %v427 = vpop.f32.mrb[0].mxu0
  %v428 = vadd.f32 %v341, %v427
  %v429 = vpop.f32.mrb[0].mxu0
  %430 = vmatprep.mubr.f32.mxu0 0.0
  %431 = vmatmul.mubr.f32.gmra.mrb[0].mxu0 %v65
  %v432 = vpop.f32.mrb[0].mxu0
  %v433 = vadd.f32 %v341, %v432
  %v434 = vpop.f32.mrb[0].mxu0
  %435 = vmatprep.mubr.f32.mxu0 0.0
  %436 = vmatmul.mubr.f32.gmra.mrb[0].mxu0 %v68
  %v437 = vpop.f32.mrb[0].mxu0
  %v438 = vadd.f32 %v341, %v437
  %v439 = vpop.f32.mrb[0].mxu0
  %440 = vmatprep.mubr.f32.mxu0 0.0
  %441 = vmatmul.mubr.f32.gmra.mrb[0].mxu0 %v71
  %v442 = vpop.f32.mrb[0].mxu0
  %v443 = vadd.f32 %v341, %v442
  %v444 = vpop.f32.mrb[0].mxu0
  %445 = vmatprep.mubr.f32.mxu0 0.0
  %446 = vmatmul.mubr.f32.gmra.mrb[0].mxu0 %v74
  %v447 = vpop.f32.mrb[0].mxu0
  %v448 = vadd.f32 %v341, %v447
  %v449 = vpop.f32.mrb[0].mxu0
  %450 = vmatprep.mubr.f32.mxu0 0.0
  %451 = vmatmul.mubr.f32.gmra.mrb[0].mxu0 %v77
  %v452 = vpop.f32.mrb[0].mxu0
  %v453 = vadd.f32 %v341, %v452
  %v454 = vpop.f32.mrb[0].mxu0
  %455 = vmatprep.mubr.f32.mxu0 0.0
  %456 = vmatmul.mubr.f32.gmra.mrb[0].mxu0 %v80
  %v457 = vpop.f32.mrb[0].mxu0
  %v458 = vadd.f32 %v341, %v457
  %v459 = vpop.f32.mrb[0].mxu0
  %460 = vmatprep.mubr.f32.mxu0 0.0
  %461 = vmatmul.mubr.f32.gmra.mrb[0].mxu0 %v83
  %v462 = vpop.f32.mrb[0].mxu0
  %v463 = vadd.f32 %v341, %v462
  %v464 = vpop.f32.mrb[0].mxu0
  %465 = vmatprep.mubr.f32.mxu0 0.0
  %466 = vmatmul.mubr.f32.gmra.mrb[0].mxu0 %v86
  %v467 = vpop.f32.mrb[0].mxu0
  %v468 = vadd.f32 %v341, %v467
  %v469 = vpop.f32.mrb[0].mxu0
  %470 = vmatprep.mubr.f32.mxu0 0.0
  %471 = vmatmul.mubr.f32.gmra.mrb[0].mxu0 %v89
  %v472 = vpop.f32.mrb[0].mxu0
  %v473 = vadd.f32 %v341, %v472
  %v474 = vpop.f32.mrb[0].mxu0
  %475 = vmatprep.mubr.f32.mxu0 0.0
  %476 = vmatmul.mubr.f32.gmra.mrb[0].mxu0 %v92
  %v477 = vpop.f32.mrb[0].mxu0
  %v478 = vadd.f32 %v341, %v477
  %v479 = vpop.f32.mrb[0].mxu0
  %480 = vmatprep.mubr.f32.mxu0 0.0
  %481 = vmatmul.mubr.f32.gmra.mrb[0].mxu0 %v95
  %v482 = vpop.f32.mrb[0].mxu0
  %v483 = vadd.f32 %v341, %v482
  %v484 = vpop.f32.mrb[0].mxu0
  %485 = vmatprep.mubr.f32.mxu0 0.0
  %486 = vmatmul.mubr.f32.gmra.mrb[0].mxu0 %v98
  %v487 = vpop.f32.mrb[0].mxu0
  %v488 = vadd.f32 %v341, %v487
  %v489 = vpop.f32.mrb[0].mxu0
  %490 = vdwg.mxu0
  %v491 = vld [vmem:[#allocation2] sm:$0xff]
  %v492 = vld [vmem:[#allocation2 + $0x10] sm:$0xff]
  %v493 = vld [vmem:[#allocation2 + $0x20] sm:$0xff]
  %v494 = vld [vmem:[#allocation2 + $0x30] sm:$0xff]
  %v495 = vld [vmem:[#allocation2 + $0x40] sm:$0xff]
  %v496 = vld [vmem:[#allocation2 + $0x50] sm:$0xff]
  %v497 = vld [vmem:[#allocation2 + $0x60] sm:$0xff]
  %v498 = vld [vmem:[#allocation2 + $0x70] sm:$0xff]
  %v499 = vld [vmem:[#allocation2 + $0xa0] sm:$0xff]
  %v500 = vld [vmem:[#allocation2 + $0xb0] sm:$0xff]
  %v501 = vld [vmem:[#allocation2 + $0xc0] sm:$0xff]
  %v502 = vld [vmem:[#allocation2 + $0xd0] sm:$0xff]
  %v503 = vld [vmem:[#allocation2 + $0xe0] sm:$0xff]
  %v504 = vld [vmem:[#allocation2 + $0xf0] sm:$0xff]
  %v505 = vld [vmem:[#allocation2 + $0x100] sm:$0xff]
  %v506 = vld [vmem:[#allocation2 + $0x110] sm:$0xff]
  %v507 = vld [vmem:[%s4] sm:$0xff]
  %v508 = vld [vmem:[%s4 + $0x8] sm:$0xff]
  %v509 = vld [vmem:[%s4 + $0x10] sm:$0xff]
  %v510 = vld [vmem:[%s4 + $0x18] sm:$0xff]
  %v511 = vld [vmem:[%s4 + $0x20] sm:$0xff]
  %v512 = vld [vmem:[%s4 + $0x28] sm:$0xff]
  %v513 = vld [vmem:[%s4 + $0x30] sm:$0xff]
  %v514 = vld [vmem:[%s4 + $0x38] sm:$0xff]
  %v515 = vld [vmem:[%s4 + $0x40] sm:$0xff]
  %v516 = vld [vmem:[%s4 + $0x48] sm:$0xff]
  %v517 = vld [vmem:[%s4 + $0x50] sm:$0xff]
  %v518 = vld [vmem:[%s4 + $0x58] sm:$0xff]
  %v519 = vld [vmem:[%s4 + $0x60] sm:$0xff]
  %v520 = vld [vmem:[%s4 + $0x68] sm:$0xff]
  %v521 = vld [vmem:[%s4 + $0x70] sm:$0xff]
  %v522 = vld [vmem:[%s4 + $0x78] sm:$0xff]
  %523 = vmatprep.subr.mxu0 0.0
  %524 = vmatpush1.msra.mxu0 %v507
  %525 = vmatprep.subr.mxu0 0.0
  %526 = vmatpush1.msra.mxu0 %v508
  %527 = vmatprep.subr.mxu0 0.0
  %528 = vmatpush1.msra.mxu0 %v509
  %529 = vmatprep.subr.mxu0 0.0
  %530 = vmatpush1.msra.mxu0 %v510
  %531 = vmatprep.subr.mxu0 0.0
  %532 = vmatpush1.msra.mxu0 %v511
  %533 = vmatprep.subr.mxu0 0.0
  %534 = vmatpush1.msra.mxu0 %v512
  %535 = vmatprep.subr.mxu0 0.0
  %536 = vmatpush1.msra.mxu0 %v513
  %537 = vmatprep.subr.mxu0 0.0
  %538 = vmatpush1.msra.mxu0 %v514
  %539 = vmatprep.subr.mxu0 0.0
  %540 = vmatpush1.msra.mxu0 %v515
  %541 = vmatprep.subr.mxu0 0.0
  %542 = vmatpush1.msra.mxu0 %v516
  %543 = vmatprep.subr.mxu0 0.0
  %544 = vmatpush1.msra.mxu0 %v517
  %545 = vmatprep.subr.mxu0 0.0
  %546 = vmatpush1.msra.mxu0 %v518
  %547 = vmatprep.subr.mxu0 0.0
  %548 = vmatpush1.msra.mxu0 %v519
  %549 = vmatprep.subr.mxu0 0.0
  %550 = vmatpush1.msra.mxu0 %v520
  %551 = vmatprep.subr.mxu0 0.0
  %552 = vmatpush1.msra.mxu0 %v521
  %553 = vmatprep.subr.mxu0 0.0
  %554 = vmatpush1.msra.mxu0 %v522
  %555 = vmatprep.subr.mxu0 0.0
  %556 = vmatpush1.msra.mxu0 0.0
  %557 = vmatprep.subr.mxu0 0.0
  %558 = vmatpush1.msra.mxu0 0.0
  %559 = vmatprep.subr.mxu0 0.0
  %560 = vmatpush1.msra.mxu0 0.0
  %561 = vmatprep.subr.mxu0 0.0
  %562 = vmatpush1.msra.mxu0 0.0
  %563 = vmatprep.subr.mxu0 0.0
  %564 = vmatpush1.msra.mxu0 0.0
  %565 = vmatprep.subr.mxu0 0.0
  %566 = vmatpush1.msra.mxu0 0.0
  %567 = vmatprep.subr.mxu0 0.0
  %568 = vmatpush1.msra.mxu0 0.0
  %569 = vmatprep.subr.mxu0 0.0
  %570 = vmatpush1.msra.mxu0 0.0
  %571 = vmatprep.subr.mxu0 0.0
  %572 = vmatpush1.msra.mxu0 0.0
  %573 = vmatprep.subr.mxu0 0.0
  %574 = vmatpush1.msra.mxu0 0.0
  %575 = vmatprep.subr.mxu0 0.0
  %576 = vmatpush1.msra.mxu0 0.0
  %577 = vmatprep.subr.mxu0 0.0
  %578 = vmatpush1.msra.mxu0 0.0
  %579 = vmatprep.subr.mxu0 0.0
  %580 = vmatpush1.msra.mxu0 0.0
  %581 = vmatprep.subr.mxu0 0.0
  %582 = vmatpush1.msra.mxu0 0.0
  %583 = vmatprep.subr.mxu0 0.0
  %584 = vmatpush1.msra.mxu0 0.0
  %585 = vmatprep.subr.mxu0 0.0
  %586 = vmatpush1.msra.mxu0 0.0
  %587 = vmatprep.mubr.f32.mxu0 0.0
  %588 = vmatmul.mubr.f32.gmra.mrb[0].mxu0 %v491
  %v589 = vpop.f32.mrb[0].mxu0
  %v590 = vadd.f32 0.0, %v589
  %v591 = vpop.f32.mrb[0].mxu0
  %592 = vmatprep.mubr.f32.mxu0 0.0
  %593 = vmatmul.mubr.f32.gmra.mrb[0].mxu0 %v492
  %v594 = vpop.f32.mrb[0].mxu0
  %v595 = vadd.f32 0.0, %v594
  %v596 = vpop.f32.mrb[0].mxu0
  %597 = vmatprep.mubr.f32.mxu0 0.0
  %598 = vmatmul.mubr.f32.gmra.mrb[0].mxu0 %v493
  %v599 = vpop.f32.mrb[0].mxu0
  %v600 = vadd.f32 0.0, %v599
  %v601 = vpop.f32.mrb[0].mxu0
  %602 = vmatprep.mubr.f32.mxu0 0.0
  %603 = vmatmul.mubr.f32.gmra.mrb[0].mxu0 %v494
  %v604 = vpop.f32.mrb[0].mxu0
  %v605 = vadd.f32 0.0, %v604
  %v606 = vpop.f32.mrb[0].mxu0
  %607 = vmatprep.mubr.f32.mxu0 0.0
  %608 = vmatmul.mubr.f32.gmra.mrb[0].mxu0 %v495
  %v609 = vpop.f32.mrb[0].mxu0
  %v610 = vadd.f32 0.0, %v609
  %v611 = vpop.f32.mrb[0].mxu0
  %612 = vmatprep.mubr.f32.mxu0 0.0
  %613 = vmatmul.mubr.f32.gmra.mrb[0].mxu0 %v496
  %v614 = vpop.f32.mrb[0].mxu0
  %v615 = vadd.f32 0.0, %v614
  %v616 = vpop.f32.mrb[0].mxu0
  %617 = vmatprep.mubr.f32.mxu0 0.0
  %618 = vmatmul.mubr.f32.gmra.mrb[0].mxu0 %v497
  %v619 = vpop.f32.mrb[0].mxu0
  %v620 = vadd.f32 0.0, %v619
  %v621 = vpop.f32.mrb[0].mxu0
  %622 = vmatprep.mubr.f32.mxu0 0.0
  %623 = vmatmul.mubr.f32.gmra.mrb[0].mxu0 %v498
  %v624 = vpop.f32.mrb[0].mxu0
  %v625 = vadd.f32 0.0, %v624
  %v626 = vpop.f32.mrb[0].mxu0
  %627 = vmatprep.mubr.f32.mxu0 0.0
  %628 = vmatmul.mubr.f32.gmra.mrb[0].mxu0 %v499
  %v629 = vpop.f32.mrb[0].mxu0
  %v630 = vadd.f32 0.0, %v629
  %v631 = vpop.f32.mrb[0].mxu0
  %632 = vmatprep.mubr.f32.mxu0 0.0
  %633 = vmatmul.mubr.f32.gmra.mrb[0].mxu0 %v500
  %v634 = vpop.f32.mrb[0].mxu0
  %v635 = vadd.f32 0.0, %v634
  %v636 = vpop.f32.mrb[0].mxu0
  %637 = vmatprep.mubr.f32.mxu0 0.0
  %638 = vmatmul.mubr.f32.gmra.mrb[0].mxu0 %v501
  %v639 = vpop.f32.mrb[0].mxu0
  %v640 = vadd.f32 0.0, %v639
  %v641 = vpop.f32.mrb[0].mxu0
  %642 = vmatprep.mubr.f32.mxu0 0.0
  %643 = vmatmul.mubr.f32.gmra.mrb[0].mxu0 %v502
  %v644 = vpop.f32.mrb[0].mxu0
  %v645 = vadd.f32 0.0, %v644
  %v646 = vpop.f32.mrb[0].mxu0
  %647 = vmatprep.mubr.f32.mxu0 0.0
  %648 = vmatmul.mubr.f32.gmra.mrb[0].mxu0 %v503
  %v649 = vpop.f32.mrb[0].mxu0
  %v650 = vadd.f32 0.0, %v649
  %v651 = vpop.f32.mrb[0].mxu0
  %652 = vmatprep.mubr.f32.mxu0 0.0
  %653 = vmatmul.mubr.f32.gmra.mrb[0].mxu0 %v504
  %v654 = vpop.f32.mrb[0].mxu0
  %v655 = vadd.f32 0.0, %v654
  %v656 = vpop.f32.mrb[0].mxu0
  %657 = vmatprep.mubr.f32.mxu0 0.0
  %658 = vmatmul.mubr.f32.gmra.mrb[0].mxu0 %v505
  %v659 = vpop.f32.mrb[0].mxu0
  %v660 = vadd.f32 0.0, %v659
  %v661 = vpop.f32.mrb[0].mxu0
  %662 = vmatprep.mubr.f32.mxu0 0.0
  %663 = vmatmul.mubr.f32.gmra.mrb[0].mxu0 %v506
  %v664 = vpop.f32.mrb[0].mxu0
  %v665 = vadd.f32 0.0, %v664
  %v666 = vpop.f32.mrb[0].mxu0
  %667 = vdwg.mxu0
  %v668 = vadd.f32 %v413, %v590
  %v669 = vadd.f32 %v418, %v595
  %v670 = vadd.f32 %v423, %v600
  %v671 = vadd.f32 %v428, %v605
  %v672 = vadd.f32 %v433, %v610
  %v673 = vadd.f32 %v438, %v615
  %v674 = vadd.f32 %v443, %v620
  %v675 = vadd.f32 %v448, %v625
  %v676 = vadd.f32 %v453, %v630
  %v677 = vadd.f32 %v458, %v635
  %v678 = vadd.f32 %v463, %v640
  %v679 = vadd.f32 %v468, %v645
  %v680 = vadd.f32 %v473, %v650
  %v681 = vadd.f32 %v478, %v655
  %v682 = vadd.f32 %v483, %v660
  %v683 = vadd.f32 %v488, %v665
  %v684 = vld [vmem:[#allocation2 + $0x1] sm:$0xff]
  %v685 = vld [vmem:[#allocation2 + $0x11] sm:$0xff]
  %v686 = vld [vmem:[#allocation2 + $0x21] sm:$0xff]
  %v687 = vld [vmem:[#allocation2 + $0x31] sm:$0xff]
  %v688 = vld [vmem:[#allocation2 + $0x41] sm:$0xff]
  %v689 = vld [vmem:[#allocation2 + $0x51] sm:$0xff]
  %v690 = vld [vmem:[#allocation2 + $0x61] sm:$0xff]
  %v691 = vld [vmem:[#allocation2 + $0x71] sm:$0xff]
  %v692 = vld [vmem:[#allocation2 + $0xa1] sm:$0xff]
  %v693 = vld [vmem:[#allocation2 + $0xb1] sm:$0xff]
  %v694 = vld [vmem:[#allocation2 + $0xc1] sm:$0xff]
  %v695 = vld [vmem:[#allocation2 + $0xd1] sm:$0xff]
  %v696 = vld [vmem:[#allocation2 + $0xe1] sm:$0xff]
  %v697 = vld [vmem:[#allocation2 + $0xf1] sm:$0xff]
  %v698 = vld [vmem:[#allocation2 + $0x101] sm:$0xff]
  %v699 = vld [vmem:[#allocation2 + $0x111] sm:$0xff]
  %s700 = scalar_lea.vmem %s4, 128
  %v701 = vld [vmem:[%s700] sm:$0xff]
  %v702 = vld [vmem:[%s700 + $0x8] sm:$0xff]
  %v703 = vld [vmem:[%s700 + $0x10] sm:$0xff]
  %v704 = vld [vmem:[%s700 + $0x18] sm:$0xff]
  %v705 = vld [vmem:[%s700 + $0x20] sm:$0xff]
  %v706 = vld [vmem:[%s700 + $0x28] sm:$0xff]
  %v707 = vld [vmem:[%s700 + $0x30] sm:$0xff]
  %v708 = vld [vmem:[%s700 + $0x38] sm:$0xff]
  %v709 = vld [vmem:[%s700 + $0x40] sm:$0xff]
  %v710 = vld [vmem:[%s700 + $0x48] sm:$0xff]
  %v711 = vld [vmem:[%s700 + $0x50] sm:$0xff]
  %v712 = vld [vmem:[%s700 + $0x58] sm:$0xff]
  %v713 = vld [vmem:[%s700 + $0x60] sm:$0xff]
  %v714 = vld [vmem:[%s700 + $0x68] sm:$0xff]
  %v715 = vld [vmem:[%s700 + $0x70] sm:$0xff]
  %v716 = vld [vmem:[%s700 + $0x78] sm:$0xff]
  %717 = vmatprep.subr.mxu0 0.0
  %718 = vmatpush1.msra.mxu0 %v701
  %719 = vmatprep.subr.mxu0 0.0
  %720 = vmatpush1.msra.mxu0 %v702
  %721 = vmatprep.subr.mxu0 0.0
  %722 = vmatpush1.msra.mxu0 %v703
  %723 = vmatprep.subr.mxu0 0.0
  %724 = vmatpush1.msra.mxu0 %v704
  %725 = vmatprep.subr.mxu0 0.0
  %726 = vmatpush1.msra.mxu0 %v705
  %727 = vmatprep.subr.mxu0 0.0
  %728 = vmatpush1.msra.mxu0 %v706
  %729 = vmatprep.subr.mxu0 0.0
  %730 = vmatpush1.msra.mxu0 %v707
  %731 = vmatprep.subr.mxu0 0.0
  %732 = vmatpush1.msra.mxu0 %v708
  %733 = vmatprep.subr.mxu0 0.0
  %734 = vmatpush1.msra.mxu0 %v709
  %735 = vmatprep.subr.mxu0 0.0
  %736 = vmatpush1.msra.mxu0 %v710
  %737 = vmatprep.subr.mxu0 0.0
  %738 = vmatpush1.msra.mxu0 %v711
  %739 = vmatprep.subr.mxu0 0.0
  %740 = vmatpush1.msra.mxu0 %v712
  %741 = vmatprep.subr.mxu0 0.0
  %742 = vmatpush1.msra.mxu0 %v713
  %743 = vmatprep.subr.mxu0 0.0
  %744 = vmatpush1.msra.mxu0 %v714
  %745 = vmatprep.subr.mxu0 0.0
  %746 = vmatpush1.msra.mxu0 %v715
  %747 = vmatprep.subr.mxu0 0.0
  %748 = vmatpush1.msra.mxu0 %v716
  %749 = vmatprep.subr.mxu0 0.0
  %750 = vmatpush1.msra.mxu0 0.0
  %751 = vmatprep.subr.mxu0 0.0
  %752 = vmatpush1.msra.mxu0 0.0
  %753 = vmatprep.subr.mxu0 0.0
  %754 = vmatpush1.msra.mxu0 0.0
  %755 = vmatprep.subr.mxu0 0.0
  %756 = vmatpush1.msra.mxu0 0.0
  %757 = vmatprep.subr.mxu0 0.0
  %758 = vmatpush1.msra.mxu0 0.0
  %759 = vmatprep.subr.mxu0 0.0
  %760 = vmatpush1.msra.mxu0 0.0
  %761 = vmatprep.subr.mxu0 0.0
  %762 = vmatpush1.msra.mxu0 0.0
  %763 = vmatprep.subr.mxu0 0.0
  %764 = vmatpush1.msra.mxu0 0.0
  %765 = vmatprep.subr.mxu0 0.0
  %766 = vmatpush1.msra.mxu0 0.0
  %767 = vmatprep.subr.mxu0 0.0
  %768 = vmatpush1.msra.mxu0 0.0
  %769 = vmatprep.subr.mxu0 0.0
  %770 = vmatpush1.msra.mxu0 0.0
  %771 = vmatprep.subr.mxu0 0.0
  %772 = vmatpush1.msra.mxu0 0.0
  %773 = vmatprep.subr.mxu0 0.0
  %774 = vmatpush1.msra.mxu0 0.0
  %775 = vmatprep.subr.mxu0 0.0
  %776 = vmatpush1.msra.mxu0 0.0
  %777 = vmatprep.subr.mxu0 0.0
  %778 = vmatpush1.msra.mxu0 0.0
  %779 = vmatprep.subr.mxu0 0.0
  %780 = vmatpush1.msra.mxu0 0.0
  %781 = vmatprep.mubr.f32.mxu0 0.0
  %782 = vmatmul.mubr.f32.gmra.mrb[0].mxu0 %v684
  %v783 = vpop.f32.mrb[0].mxu0
  %v784 = vadd.f32 0.0, %v783
  %v785 = vpop.f32.mrb[0].mxu0
  %786 = vmatprep.mubr.f32.mxu0 0.0
  %787 = vmatmul.mubr.f32.gmra.mrb[0].mxu0 %v685
  %v788 = vpop.f32.mrb[0].mxu0
  %v789 = vadd.f32 0.0, %v788
  %v790 = vpop.f32.mrb[0].mxu0
  %791 = vmatprep.mubr.f32.mxu0 0.0
  %792 = vmatmul.mubr.f32.gmra.mrb[0].mxu0 %v686
  %v793 = vpop.f32.mrb[0].mxu0
  %v794 = vadd.f32 0.0, %v793
  %v795 = vpop.f32.mrb[0].mxu0
  %796 = vmatprep.mubr.f32.mxu0 0.0
  %797 = vmatmul.mubr.f32.gmra.mrb[0].mxu0 %v687
  %v798 = vpop.f32.mrb[0].mxu0
  %v799 = vadd.f32 0.0, %v798
  %v800 = vpop.f32.mrb[0].mxu0
  %801 = vmatprep.mubr.f32.mxu0 0.0
  %802 = vmatmul.mubr.f32.gmra.mrb[0].mxu0 %v688
  %v803 = vpop.f32.mrb[0].mxu0
  %v804 = vadd.f32 0.0, %v803
  %v805 = vpop.f32.mrb[0].mxu0
  %806 = vmatprep.mubr.f32.mxu0 0.0
  %807 = vmatmul.mubr.f32.gmra.mrb[0].mxu0 %v689
  %v808 = vpop.f32.mrb[0].mxu0
  %v809 = vadd.f32 0.0, %v808
  %v810 = vpop.f32.mrb[0].mxu0
  %811 = vmatprep.mubr.f32.mxu0 0.0
  %812 = vmatmul.mubr.f32.gmra.mrb[0].mxu0 %v690
  %v813 = vpop.f32.mrb[0].mxu0
  %v814 = vadd.f32 0.0, %v813
  %v815 = vpop.f32.mrb[0].mxu0
  %816 = vmatprep.mubr.f32.mxu0 0.0
  %817 = vmatmul.mubr.f32.gmra.mrb[0].mxu0 %v691
  %v818 = vpop.f32.mrb[0].mxu0
  %v819 = vadd.f32 0.0, %v818
  %v820 = vpop.f32.mrb[0].mxu0
  %821 = vmatprep.mubr.f32.mxu0 0.0
  %822 = vmatmul.mubr.f32.gmra.mrb[0].mxu0 %v692
  %v823 = vpop.f32.mrb[0].mxu0
  %v824 = vadd.f32 0.0, %v823
  %v825 = vpop.f32.mrb[0].mxu0
  %826 = vmatprep.mubr.f32.mxu0 0.0
  %827 = vmatmul.mubr.f32.gmra.mrb[0].mxu0 %v693
  %v828 = vpop.f32.mrb[0].mxu0
  %v829 = vadd.f32 0.0, %v828
  %v830 = vpop.f32.mrb[0].mxu0
  %831 = vmatprep.mubr.f32.mxu0 0.0
  %832 = vmatmul.mubr.f32.gmra.mrb[0].mxu0 %v694
  %v833 = vpop.f32.mrb[0].mxu0
  %v834 = vadd.f32 0.0, %v833
  %v835 = vpop.f32.mrb[0].mxu0
  %836 = vmatprep.mubr.f32.mxu0 0.0
  %837 = vmatmul.mubr.f32.gmra.mrb[0].mxu0 %v695
  %v838 = vpop.f32.mrb[0].mxu0
  %v839 = vadd.f32 0.0, %v838
  %v840 = vpop.f32.mrb[0].mxu0
  %841 = vmatprep.mubr.f32.mxu0 0.0
  %842 = vmatmul.mubr.f32.gmra.mrb[0].mxu0 %v696
  %v843 = vpop.f32.mrb[0].mxu0
  %v844 = vadd.f32 0.0, %v843
  %v845 = vpop.f32.mrb[0].mxu0
  %846 = vmatprep.mubr.f32.mxu0 0.0
  %847 = vmatmul.mubr.f32.gmra.mrb[0].mxu0 %v697
  %v848 = vpop.f32.mrb[0].mxu0
  %v849 = vadd.f32 0.0, %v848
  %v850 = vpop.f32.mrb[0].mxu0
  %851 = vmatprep.mubr.f32.mxu0 0.0
  %852 = vmatmul.mubr.f32.gmra.mrb[0].mxu0 %v698
  %v853 = vpop.f32.mrb[0].mxu0
  %v854 = vadd.f32 0.0, %v853
  %v855 = vpop.f32.mrb[0].mxu0
  %856 = vmatprep.mubr.f32.mxu0 0.0
  %857 = vmatmul.mubr.f32.gmra.mrb[0].mxu0 %v699
  %v858 = vpop.f32.mrb[0].mxu0
  %v859 = vadd.f32 0.0, %v858
  %v860 = vpop.f32.mrb[0].mxu0
  %861 = vdwg.mxu0
  %v862 = vadd.f32 %v668, %v784
  %v863 = vadd.f32 %v669, %v789
  %v864 = vadd.f32 %v670, %v794
  %v865 = vadd.f32 %v671, %v799
  %v866 = vadd.f32 %v672, %v804
  %v867 = vadd.f32 %v673, %v809
  %v868 = vadd.f32 %v674, %v814
  %v869 = vadd.f32 %v675, %v819
  %v870 = vadd.f32 %v676, %v824
  %v871 = vadd.f32 %v677, %v829
  %v872 = vadd.f32 %v678, %v834
  %v873 = vadd.f32 %v679, %v839
  %v874 = vadd.f32 %v680, %v844
  %v875 = vadd.f32 %v681, %v849
  %v876 = vadd.f32 %v682, %v854
  %v877 = vadd.f32 %v683, %v859
  %v878 = vld [vmem:[#allocation2 + $0x2] sm:$0xff]
  %v879 = vld [vmem:[#allocation2 + $0x12] sm:$0xff]
  %v880 = vld [vmem:[#allocation2 + $0x22] sm:$0xff]
  %v881 = vld [vmem:[#allocation2 + $0x32] sm:$0xff]
  %v882 = vld [vmem:[#allocation2 + $0x42] sm:$0xff]
  %v883 = vld [vmem:[#allocation2 + $0x52] sm:$0xff]
  %v884 = vld [vmem:[#allocation2 + $0x62] sm:$0xff]
  %v885 = vld [vmem:[#allocation2 + $0x72] sm:$0xff]
  %v886 = vld [vmem:[#allocation2 + $0xa2] sm:$0xff]
  %v887 = vld [vmem:[#allocation2 + $0xb2] sm:$0xff]
  %v888 = vld [vmem:[#allocation2 + $0xc2] sm:$0xff]
  %v889 = vld [vmem:[#allocation2 + $0xd2] sm:$0xff]
  %v890 = vld [vmem:[#allocation2 + $0xe2] sm:$0xff]
  %v891 = vld [vmem:[#allocation2 + $0xf2] sm:$0xff]
  %v892 = vld [vmem:[#allocation2 + $0x102] sm:$0xff]
  %v893 = vld [vmem:[#allocation2 + $0x112] sm:$0xff]
  %s894 = scalar_lea.vmem %s4, 256
  %v895 = vld [vmem:[%s894] sm:$0xff]
  %v896 = vld [vmem:[%s894 + $0x8] sm:$0xff]
  %v897 = vld [vmem:[%s894 + $0x10] sm:$0xff]
  %v898 = vld [vmem:[%s894 + $0x18] sm:$0xff]
  %v899 = vld [vmem:[%s894 + $0x20] sm:$0xff]
  %v900 = vld [vmem:[%s894 + $0x28] sm:$0xff]
  %v901 = vld [vmem:[%s894 + $0x30] sm:$0xff]
  %v902 = vld [vmem:[%s894 + $0x38] sm:$0xff]
  %v903 = vld [vmem:[%s894 + $0x40] sm:$0xff]
  %v904 = vld [vmem:[%s894 + $0x48] sm:$0xff]
  %v905 = vld [vmem:[%s894 + $0x50] sm:$0xff]
  %v906 = vld [vmem:[%s894 + $0x58] sm:$0xff]
  %v907 = vld [vmem:[%s894 + $0x60] sm:$0xff]
  %v908 = vld [vmem:[%s894 + $0x68] sm:$0xff]
  %v909 = vld [vmem:[%s894 + $0x70] sm:$0xff]
  %v910 = vld [vmem:[%s894 + $0x78] sm:$0xff]
  %911 = vmatprep.subr.mxu0 0.0
  %912 = vmatpush1.msra.mxu0 %v895
  %913 = vmatprep.subr.mxu0 0.0
  %914 = vmatpush1.msra.mxu0 %v896
  %915 = vmatprep.subr.mxu0 0.0
  %916 = vmatpush1.msra.mxu0 %v897
  %917 = vmatprep.subr.mxu0 0.0
  %918 = vmatpush1.msra.mxu0 %v898
  %919 = vmatprep.subr.mxu0 0.0
  %920 = vmatpush1.msra.mxu0 %v899
  %921 = vmatprep.subr.mxu0 0.0
  %922 = vmatpush1.msra.mxu0 %v900
  %923 = vmatprep.subr.mxu0 0.0
  %924 = vmatpush1.msra.mxu0 %v901
  %925 = vmatprep.subr.mxu0 0.0
  %926 = vmatpush1.msra.mxu0 %v902
  %927 = vmatprep.subr.mxu0 0.0
  %928 = vmatpush1.msra.mxu0 %v903
  %929 = vmatprep.subr.mxu0 0.0
  %930 = vmatpush1.msra.mxu0 %v904
  %931 = vmatprep.subr.mxu0 0.0
  %932 = vmatpush1.msra.mxu0 %v905
  %933 = vmatprep.subr.mxu0 0.0
  %934 = vmatpush1.msra.mxu0 %v906
  %935 = vmatprep.subr.mxu0 0.0
  %936 = vmatpush1.msra.mxu0 %v907
  %937 = vmatprep.subr.mxu0 0.0
  %938 = vmatpush1.msra.mxu0 %v908
  %939 = vmatprep.subr.mxu0 0.0
  %940 = vmatpush1.msra.mxu0 %v909
  %941 = vmatprep.subr.mxu0 0.0
  %942 = vmatpush1.msra.mxu0 %v910
  %943 = vmatprep.subr.mxu0 0.0
  %944 = vmatpush1.msra.mxu0 0.0
  %945 = vmatprep.subr.mxu0 0.0
  %946 = vmatpush1.msra.mxu0 0.0
  %947 = vmatprep.subr.mxu0 0.0
  %948 = vmatpush1.msra.mxu0 0.0
  %949 = vmatprep.subr.mxu0 0.0
  %950 = vmatpush1.msra.mxu0 0.0
  %951 = vmatprep.subr.mxu0 0.0
  %952 = vmatpush1.msra.mxu0 0.0
  %953 = vmatprep.subr.mxu0 0.0
  %954 = vmatpush1.msra.mxu0 0.0
  %955 = vmatprep.subr.mxu0 0.0
  %956 = vmatpush1.msra.mxu0 0.0
  %957 = vmatprep.subr.mxu0 0.0
  %958 = vmatpush1.msra.mxu0 0.0
  %959 = vmatprep.subr.mxu0 0.0
  %960 = vmatpush1.msra.mxu0 0.0
  %961 = vmatprep.subr.mxu0 0.0
  %962 = vmatpush1.msra.mxu0 0.0
  %963 = vmatprep.subr.mxu0 0.0
  %964 = vmatpush1.msra.mxu0 0.0
  %965 = vmatprep.subr.mxu0 0.0
  %966 = vmatpush1.msra.mxu0 0.0
  %967 = vmatprep.subr.mxu0 0.0
  %968 = vmatpush1.msra.mxu0 0.0
  %969 = vmatprep.subr.mxu0 0.0
  %970 = vmatpush1.msra.mxu0 0.0
  %971 = vmatprep.subr.mxu0 0.0
  %972 = vmatpush1.msra.mxu0 0.0
  %973 = vmatprep.subr.mxu0 0.0
  %974 = vmatpush1.msra.mxu0 0.0
  %975 = vmatprep.mubr.f32.mxu0 0.0
  %976 = vmatmul.mubr.f32.gmra.mrb[0].mxu0 %v878
  %v977 = vpop.f32.mrb[0].mxu0
  %v978 = vadd.f32 0.0, %v977
  %v979 = vpop.f32.mrb[0].mxu0
  %980 = vmatprep.mubr.f32.mxu0 0.0
  %981 = vmatmul.mubr.f32.gmra.mrb[0].mxu0 %v879
  %v982 = vpop.f32.mrb[0].mxu0
  %v983 = vadd.f32 0.0, %v982
  %v984 = vpop.f32.mrb[0].mxu0
  %985 = vmatprep.mubr.f32.mxu0 0.0
  %986 = vmatmul.mubr.f32.gmra.mrb[0].mxu0 %v880
  %v987 = vpop.f32.mrb[0].mxu0
  %v988 = vadd.f32 0.0, %v987
  %v989 = vpop.f32.mrb[0].mxu0
  %990 = vmatprep.mubr.f32.mxu0 0.0
  %991 = vmatmul.mubr.f32.gmra.mrb[0].mxu0 %v881
  %v992 = vpop.f32.mrb[0].mxu0
  %v993 = vadd.f32 0.0, %v992
  %v994 = vpop.f32.mrb[0].mxu0
  %995 = vmatprep.mubr.f32.mxu0 0.0
  %996 = vmatmul.mubr.f32.gmra.mrb[0].mxu0 %v882
  %v997 = vpop.f32.mrb[0].mxu0
  %v998 = vadd.f32 0.0, %v997
  %v999 = vpop.f32.mrb[0].mxu0
  %1000 = vmatprep.mubr.f32.mxu0 0.0
  %1001 = vmatmul.mubr.f32.gmra.mrb[0].mxu0 %v883
  %v1002 = vpop.f32.mrb[0].mxu0
  %v1003 = vadd.f32 0.0, %v1002
  %v1004 = vpop.f32.mrb[0].mxu0
  %1005 = vmatprep.mubr.f32.mxu0 0.0
  %1006 = vmatmul.mubr.f32.gmra.mrb[0].mxu0 %v884
  %v1007 = vpop.f32.mrb[0].mxu0
  %v1008 = vadd.f32 0.0, %v1007
  %v1009 = vpop.f32.mrb[0].mxu0
  %1010 = vmatprep.mubr.f32.mxu0 0.0
  %1011 = vmatmul.mubr.f32.gmra.mrb[0].mxu0 %v885
  %v1012 = vpop.f32.mrb[0].mxu0
  %v1013 = vadd.f32 0.0, %v1012
  %v1014 = vpop.f32.mrb[0].mxu0
  %1015 = vmatprep.mubr.f32.mxu0 0.0
  %1016 = vmatmul.mubr.f32.gmra.mrb[0].mxu0 %v886
  %v1017 = vpop.f32.mrb[0].mxu0
  %v1018 = vadd.f32 0.0, %v1017
  %v1019 = vpop.f32.mrb[0].mxu0
  %1020 = vmatprep.mubr.f32.mxu0 0.0
  %1021 = vmatmul.mubr.f32.gmra.mrb[0].mxu0 %v887
  %v1022 = vpop.f32.mrb[0].mxu0
  %v1023 = vadd.f32 0.0, %v1022
  %v1024 = vpop.f32.mrb[0].mxu0
  %1025 = vmatprep.mubr.f32.mxu0 0.0
  %1026 = vmatmul.mubr.f32.gmra.mrb[0].mxu0 %v888
  %v1027 = vpop.f32.mrb[0].mxu0
  %v1028 = vadd.f32 0.0, %v1027
  %v1029 = vpop.f32.mrb[0].mxu0
  %1030 = vmatprep.mubr.f32.mxu0 0.0
  %1031 = vmatmul.mubr.f32.gmra.mrb[0].mxu0 %v889
  %v1032 = vpop.f32.mrb[0].mxu0
  %v1033 = vadd.f32 0.0, %v1032
  %v1034 = vpop.f32.mrb[0].mxu0
  %1035 = vmatprep.mubr.f32.mxu0 0.0
  %1036 = vmatmul.mubr.f32.gmra.mrb[0].mxu0 %v890
  %v1037 = vpop.f32.mrb[0].mxu0
  %v1038 = vadd.f32 0.0, %v1037
  %v1039 = vpop.f32.mrb[0].mxu0
  %1040 = vmatprep.mubr.f32.mxu0 0.0
  %1041 = vmatmul.mubr.f32.gmra.mrb[0].mxu0 %v891
  %v1042 = vpop.f32.mrb[0].mxu0
  %v1043 = vadd.f32 0.0, %v1042
  %v1044 = vpop.f32.mrb[0].mxu0
  %1045 = vmatprep.mubr.f32.mxu0 0.0
  %1046 = vmatmul.mubr.f32.gmra.mrb[0].mxu0 %v892
  %v1047 = vpop.f32.mrb[0].mxu0
  %v1048 = vadd.f32 0.0, %v1047
  %v1049 = vpop.f32.mrb[0].mxu0
  %1050 = vmatprep.mubr.f32.mxu0 0.0
  %1051 = vmatmul.mubr.f32.gmra.mrb[0].mxu0 %v893
  %v1052 = vpop.f32.mrb[0].mxu0
  %v1053 = vadd.f32 0.0, %v1052
  %v1054 = vpop.f32.mrb[0].mxu0
  %1055 = vdwg.mxu0
  %v1056 = vadd.f32 %v862, %v978
  %v1057 = vadd.f32 %v863, %v983
  %v1058 = vadd.f32 %v864, %v988
  %v1059 = vadd.f32 %v865, %v993
  %v1060 = vadd.f32 %v866, %v998
  %v1061 = vadd.f32 %v867, %v1003
  %v1062 = vadd.f32 %v868, %v1008
  %v1063 = vadd.f32 %v869, %v1013
  %v1064 = vadd.f32 %v870, %v1018
  %v1065 = vadd.f32 %v871, %v1023
  %v1066 = vadd.f32 %v872, %v1028
  %v1067 = vadd.f32 %v873, %v1033
  %v1068 = vadd.f32 %v874, %v1038
  %v1069 = vadd.f32 %v875, %v1043
  %v1070 = vadd.f32 %v876, %v1048
  %v1071 = vadd.f32 %v877, %v1053
  %v1072 = vld [vmem:[%s319] sm:$0xff]
  %v1073 = vld [vmem:[%s319 + $0x10] sm:$0xff]
  %v1074 = vld [vmem:[%s319 + $0x20] sm:$0xff]
  %v1075 = vld [vmem:[%s319 + $0x30] sm:$0xff]
  %v1076 = vld [vmem:[%s319 + $0x40] sm:$0xff]
  %v1077 = vld [vmem:[%s319 + $0x50] sm:$0xff]
  %v1078 = vld [vmem:[%s319 + $0x60] sm:$0xff]
  %v1079 = vld [vmem:[%s319 + $0x70] sm:$0xff]
  %v1080 = vld [vmem:[%s319 + $0xa0] sm:$0xff]
  %v1081 = vld [vmem:[%s319 + $0xb0] sm:$0xff]
  %v1082 = vld [vmem:[%s319 + $0xc0] sm:$0xff]
  %v1083 = vld [vmem:[%s319 + $0xd0] sm:$0xff]
  %v1084 = vld [vmem:[%s319 + $0xe0] sm:$0xff]
  %v1085 = vld [vmem:[%s319 + $0xf0] sm:$0xff]
  %v1086 = vld [vmem:[%s319 + $0x100] sm:$0xff]
  %v1087 = vld [vmem:[%s319 + $0x110] sm:$0xff]
  %s1088 = scalar_lea.vmem %s4, 384
  %v1089 = vld [vmem:[%s1088] sm:$0xff]
  %v1090 = vld [vmem:[%s1088 + $0x8] sm:$0xff]
  %v1091 = vld [vmem:[%s1088 + $0x10] sm:$0xff]
  %v1092 = vld [vmem:[%s1088 + $0x18] sm:$0xff]
  %v1093 = vld [vmem:[%s1088 + $0x20] sm:$0xff]
  %v1094 = vld [vmem:[%s1088 + $0x28] sm:$0xff]
  %v1095 = vld [vmem:[%s1088 + $0x30] sm:$0xff]
  %v1096 = vld [vmem:[%s1088 + $0x38] sm:$0xff]
  %v1097 = vld [vmem:[%s1088 + $0x40] sm:$0xff]
  %v1098 = vld [vmem:[%s1088 + $0x48] sm:$0xff]
  %v1099 = vld [vmem:[%s1088 + $0x50] sm:$0xff]
  %v1100 = vld [vmem:[%s1088 + $0x58] sm:$0xff]
  %v1101 = vld [vmem:[%s1088 + $0x60] sm:$0xff]
  %v1102 = vld [vmem:[%s1088 + $0x68] sm:$0xff]
  %v1103 = vld [vmem:[%s1088 + $0x70] sm:$0xff]
  %v1104 = vld [vmem:[%s1088 + $0x78] sm:$0xff]
  %1105 = vmatprep.subr.mxu0 0.0
  %1106 = vmatpush1.msra.mxu0 %v1089
  %1107 = vmatprep.subr.mxu0 0.0
  %1108 = vmatpush1.msra.mxu0 %v1090
  %1109 = vmatprep.subr.mxu0 0.0
  %1110 = vmatpush1.msra.mxu0 %v1091
  %1111 = vmatprep.subr.mxu0 0.0
  %1112 = vmatpush1.msra.mxu0 %v1092
  %1113 = vmatprep.subr.mxu0 0.0
  %1114 = vmatpush1.msra.mxu0 %v1093
  %1115 = vmatprep.subr.mxu0 0.0
  %1116 = vmatpush1.msra.mxu0 %v1094
  %1117 = vmatprep.subr.mxu0 0.0
  %1118 = vmatpush1.msra.mxu0 %v1095
  %1119 = vmatprep.subr.mxu0 0.0
  %1120 = vmatpush1.msra.mxu0 %v1096
  %1121 = vmatprep.subr.mxu0 0.0
  %1122 = vmatpush1.msra.mxu0 %v1097
  %1123 = vmatprep.subr.mxu0 0.0
  %1124 = vmatpush1.msra.mxu0 %v1098
  %1125 = vmatprep.subr.mxu0 0.0
  %1126 = vmatpush1.msra.mxu0 %v1099
  %1127 = vmatprep.subr.mxu0 0.0
  %1128 = vmatpush1.msra.mxu0 %v1100
  %1129 = vmatprep.subr.mxu0 0.0
  %1130 = vmatpush1.msra.mxu0 %v1101
  %1131 = vmatprep.subr.mxu0 0.0
  %1132 = vmatpush1.msra.mxu0 %v1102
  %1133 = vmatprep.subr.mxu0 0.0
  %1134 = vmatpush1.msra.mxu0 %v1103
  %1135 = vmatprep.subr.mxu0 0.0
  %1136 = vmatpush1.msra.mxu0 %v1104
  %1137 = vmatprep.subr.mxu0 0.0
  %1138 = vmatpush1.msra.mxu0 0.0
  %1139 = vmatprep.subr.mxu0 0.0
  %1140 = vmatpush1.msra.mxu0 0.0
  %1141 = vmatprep.subr.mxu0 0.0
  %1142 = vmatpush1.msra.mxu0 0.0
  %1143 = vmatprep.subr.mxu0 0.0
  %1144 = vmatpush1.msra.mxu0 0.0
  %1145 = vmatprep.subr.mxu0 0.0
  %1146 = vmatpush1.msra.mxu0 0.0
  %1147 = vmatprep.subr.mxu0 0.0
  %1148 = vmatpush1.msra.mxu0 0.0
  %1149 = vmatprep.subr.mxu0 0.0
  %1150 = vmatpush1.msra.mxu0 0.0
  %1151 = vmatprep.subr.mxu0 0.0
  %1152 = vmatpush1.msra.mxu0 0.0
  %1153 = vmatprep.subr.mxu0 0.0
  %1154 = vmatpush1.msra.mxu0 0.0
  %1155 = vmatprep.subr.mxu0 0.0
  %1156 = vmatpush1.msra.mxu0 0.0
  %1157 = vmatprep.subr.mxu0 0.0
  %1158 = vmatpush1.msra.mxu0 0.0
  %1159 = vmatprep.subr.mxu0 0.0
  %1160 = vmatpush1.msra.mxu0 0.0
  %1161 = vmatprep.subr.mxu0 0.0
  %1162 = vmatpush1.msra.mxu0 0.0
  %1163 = vmatprep.subr.mxu0 0.0
  %1164 = vmatpush1.msra.mxu0 0.0
  %1165 = vmatprep.subr.mxu0 0.0
  %1166 = vmatpush1.msra.mxu0 0.0
  %1167 = vmatprep.subr.mxu0 0.0
  %1168 = vmatpush1.msra.mxu0 0.0
  %1169 = vmatprep.mubr.f32.mxu0 0.0
  %1170 = vmatmul.mubr.f32.gmra.mrb[0].mxu0 %v1072
  %v1171 = vpop.f32.mrb[0].mxu0
  %v1172 = vadd.f32 0.0, %v1171
  %v1173 = vpop.f32.mrb[0].mxu0
  %1174 = vmatprep.mubr.f32.mxu0 0.0
  %1175 = vmatmul.mubr.f32.gmra.mrb[0].mxu0 %v1073
  %v1176 = vpop.f32.mrb[0].mxu0
  %v1177 = vadd.f32 0.0, %v1176
  %v1178 = vpop.f32.mrb[0].mxu0
  %1179 = vmatprep.mubr.f32.mxu0 0.0
  %1180 = vmatmul.mubr.f32.gmra.mrb[0].mxu0 %v1074
  %v1181 = vpop.f32.mrb[0].mxu0
  %v1182 = vadd.f32 0.0, %v1181
  %v1183 = vpop.f32.mrb[0].mxu0
  %1184 = vmatprep.mubr.f32.mxu0 0.0
  %1185 = vmatmul.mubr.f32.gmra.mrb[0].mxu0 %v1075
  %v1186 = vpop.f32.mrb[0].mxu0
  %v1187 = vadd.f32 0.0, %v1186
  %v1188 = vpop.f32.mrb[0].mxu0
  %1189 = vmatprep.mubr.f32.mxu0 0.0
  %1190 = vmatmul.mubr.f32.gmra.mrb[0].mxu0 %v1076
  %v1191 = vpop.f32.mrb[0].mxu0
  %v1192 = vadd.f32 0.0, %v1191
  %v1193 = vpop.f32.mrb[0].mxu0
  %1194 = vmatprep.mubr.f32.mxu0 0.0
  %1195 = vmatmul.mubr.f32.gmra.mrb[0].mxu0 %v1077
  %v1196 = vpop.f32.mrb[0].mxu0
  %v1197 = vadd.f32 0.0, %v1196
  %v1198 = vpop.f32.mrb[0].mxu0
  %1199 = vmatprep.mubr.f32.mxu0 0.0
  %1200 = vmatmul.mubr.f32.gmra.mrb[0].mxu0 %v1078
  %v1201 = vpop.f32.mrb[0].mxu0
  %v1202 = vadd.f32 0.0, %v1201
  %v1203 = vpop.f32.mrb[0].mxu0
  %1204 = vmatprep.mubr.f32.mxu0 0.0
  %1205 = vmatmul.mubr.f32.gmra.mrb[0].mxu0 %v1079
  %v1206 = vpop.f32.mrb[0].mxu0
  %v1207 = vadd.f32 0.0, %v1206
  %v1208 = vpop.f32.mrb[0].mxu0
  %1209 = vmatprep.mubr.f32.mxu0 0.0
  %1210 = vmatmul.mubr.f32.gmra.mrb[0].mxu0 %v1080
  %v1211 = vpop.f32.mrb[0].mxu0
  %v1212 = vadd.f32 0.0, %v1211
  %v1213 = vpop.f32.mrb[0].mxu0
  %1214 = vmatprep.mubr.f32.mxu0 0.0
  %1215 = vmatmul.mubr.f32.gmra.mrb[0].mxu0 %v1081
  %v1216 = vpop.f32.mrb[0].mxu0
  %v1217 = vadd.f32 0.0, %v1216
  %v1218 = vpop.f32.mrb[0].mxu0
  %1219 = vmatprep.mubr.f32.mxu0 0.0
  %1220 = vmatmul.mubr.f32.gmra.mrb[0].mxu0 %v1082
  %v1221 = vpop.f32.mrb[0].mxu0
  %v1222 = vadd.f32 0.0, %v1221
  %v1223 = vpop.f32.mrb[0].mxu0
  %1224 = vmatprep.mubr.f32.mxu0 0.0
  %1225 = vmatmul.mubr.f32.gmra.mrb[0].mxu0 %v1083
  %v1226 = vpop.f32.mrb[0].mxu0
  %v1227 = vadd.f32 0.0, %v1226
  %v1228 = vpop.f32.mrb[0].mxu0
  %1229 = vmatprep.mubr.f32.mxu0 0.0
  %1230 = vmatmul.mubr.f32.gmra.mrb[0].mxu0 %v1084
  %v1231 = vpop.f32.mrb[0].mxu0
  %v1232 = vadd.f32 0.0, %v1231
  %v1233 = vpop.f32.mrb[0].mxu0
  %1234 = vmatprep.mubr.f32.mxu0 0.0
  %1235 = vmatmul.mubr.f32.gmra.mrb[0].mxu0 %v1085
  %v1236 = vpop.f32.mrb[0].mxu0
  %v1237 = vadd.f32 0.0, %v1236
  %v1238 = vpop.f32.mrb[0].mxu0
  %1239 = vmatprep.mubr.f32.mxu0 0.0
  %1240 = vmatmul.mubr.f32.gmra.mrb[0].mxu0 %v1086
  %v1241 = vpop.f32.mrb[0].mxu0
  %v1242 = vadd.f32 0.0, %v1241
  %v1243 = vpop.f32.mrb[0].mxu0
  %1244 = vmatprep.mubr.f32.mxu0 0.0
  %1245 = vmatmul.mubr.f32.gmra.mrb[0].mxu0 %v1087
  %v1246 = vpop.f32.mrb[0].mxu0
  %v1247 = vadd.f32 0.0, %v1246
  %v1248 = vpop.f32.mrb[0].mxu0
  %1249 = vdwg.mxu0
  %v1250 = vadd.f32 %v1056, %v1172
  %v1251 = vadd.f32 %v1057, %v1177
  %v1252 = vadd.f32 %v1058, %v1182
  %v1253 = vadd.f32 %v1059, %v1187
  %v1254 = vadd.f32 %v1060, %v1192
  %v1255 = vadd.f32 %v1061, %v1197
  %v1256 = vadd.f32 %v1062, %v1202
  %v1257 = vadd.f32 %v1063, %v1207
  %v1258 = vadd.f32 %v1064, %v1212
  %v1259 = vadd.f32 %v1065, %v1217
  %v1260 = vadd.f32 %v1066, %v1222
  %v1261 = vadd.f32 %v1067, %v1227
  %v1262 = vadd.f32 %v1068, %v1232
  %v1263 = vadd.f32 %v1069, %v1237
  %v1264 = vadd.f32 %v1070, %v1242
  %v1265 = vadd.f32 %v1071, %v1247
  %v1266 = vld [vmem:[%s319 + $0x1] sm:$0xff]
  %v1267 = vld [vmem:[%s319 + $0x11] sm:$0xff]
  %v1268 = vld [vmem:[%s319 + $0x21] sm:$0xff]
  %v1269 = vld [vmem:[%s319 + $0x31] sm:$0xff]
  %v1270 = vld [vmem:[%s319 + $0x41] sm:$0xff]
  %v1271 = vld [vmem:[%s319 + $0x51] sm:$0xff]
  %v1272 = vld [vmem:[%s319 + $0x61] sm:$0xff]
  %v1273 = vld [vmem:[%s319 + $0x71] sm:$0xff]
  %v1274 = vld [vmem:[%s319 + $0xa1] sm:$0xff]
  %v1275 = vld [vmem:[%s319 + $0xb1] sm:$0xff]
  %v1276 = vld [vmem:[%s319 + $0xc1] sm:$0xff]
  %v1277 = vld [vmem:[%s319 + $0xd1] sm:$0xff]
  %v1278 = vld [vmem:[%s319 + $0xe1] sm:$0xff]
  %v1279 = vld [vmem:[%s319 + $0xf1] sm:$0xff]
  %v1280 = vld [vmem:[%s319 + $0x101] sm:$0xff]
  %v1281 = vld [vmem:[%s319 + $0x111] sm:$0xff]
  %s1282 = scalar_lea.vmem %s4, 512
  %v1283 = vld [vmem:[%s1282] sm:$0xff]
  %v1284 = vld [vmem:[%s1282 + $0x8] sm:$0xff]
  %v1285 = vld [vmem:[%s1282 + $0x10] sm:$0xff]
  %v1286 = vld [vmem:[%s1282 + $0x18] sm:$0xff]
  %v1287 = vld [vmem:[%s1282 + $0x20] sm:$0xff]
  %v1288 = vld [vmem:[%s1282 + $0x28] sm:$0xff]
  %v1289 = vld [vmem:[%s1282 + $0x30] sm:$0xff]
  %v1290 = vld [vmem:[%s1282 + $0x38] sm:$0xff]
  %v1291 = vld [vmem:[%s1282 + $0x40] sm:$0xff]
  %v1292 = vld [vmem:[%s1282 + $0x48] sm:$0xff]
  %v1293 = vld [vmem:[%s1282 + $0x50] sm:$0xff]
  %v1294 = vld [vmem:[%s1282 + $0x58] sm:$0xff]
  %v1295 = vld [vmem:[%s1282 + $0x60] sm:$0xff]
  %v1296 = vld [vmem:[%s1282 + $0x68] sm:$0xff]
  %v1297 = vld [vmem:[%s1282 + $0x70] sm:$0xff]
  %v1298 = vld [vmem:[%s1282 + $0x78] sm:$0xff]
  %1299 = vmatprep.subr.mxu0 0.0
  %1300 = vmatpush1.msra.mxu0 %v1283
  %1301 = vmatprep.subr.mxu0 0.0
  %1302 = vmatpush1.msra.mxu0 %v1284
  %1303 = vmatprep.subr.mxu0 0.0
  %1304 = vmatpush1.msra.mxu0 %v1285
  %1305 = vmatprep.subr.mxu0 0.0
  %1306 = vmatpush1.msra.mxu0 %v1286
  %1307 = vmatprep.subr.mxu0 0.0
  %1308 = vmatpush1.msra.mxu0 %v1287
  %1309 = vmatprep.subr.mxu0 0.0
  %1310 = vmatpush1.msra.mxu0 %v1288
  %1311 = vmatprep.subr.mxu0 0.0
  %1312 = vmatpush1.msra.mxu0 %v1289
  %1313 = vmatprep.subr.mxu0 0.0
  %1314 = vmatpush1.msra.mxu0 %v1290
  %1315 = vmatprep.subr.mxu0 0.0
  %1316 = vmatpush1.msra.mxu0 %v1291
  %1317 = vmatprep.subr.mxu0 0.0
  %1318 = vmatpush1.msra.mxu0 %v1292
  %1319 = vmatprep.subr.mxu0 0.0
  %1320 = vmatpush1.msra.mxu0 %v1293
  %1321 = vmatprep.subr.mxu0 0.0
  %1322 = vmatpush1.msra.mxu0 %v1294
  %1323 = vmatprep.subr.mxu0 0.0
  %1324 = vmatpush1.msra.mxu0 %v1295
  %1325 = vmatprep.subr.mxu0 0.0
  %1326 = vmatpush1.msra.mxu0 %v1296
  %1327 = vmatprep.subr.mxu0 0.0
  %1328 = vmatpush1.msra.mxu0 %v1297
  %1329 = vmatprep.subr.mxu0 0.0
  %1330 = vmatpush1.msra.mxu0 %v1298
  %1331 = vmatprep.subr.mxu0 0.0
  %1332 = vmatpush1.msra.mxu0 0.0
  %1333 = vmatprep.subr.mxu0 0.0
  %1334 = vmatpush1.msra.mxu0 0.0
  %1335 = vmatprep.subr.mxu0 0.0
  %1336 = vmatpush1.msra.mxu0 0.0
  %1337 = vmatprep.subr.mxu0 0.0
  %1338 = vmatpush1.msra.mxu0 0.0
  %1339 = vmatprep.subr.mxu0 0.0
  %1340 = vmatpush1.msra.mxu0 0.0
  %1341 = vmatprep.subr.mxu0 0.0
  %1342 = vmatpush1.msra.mxu0 0.0
  %1343 = vmatprep.subr.mxu0 0.0
  %1344 = vmatpush1.msra.mxu0 0.0
  %1345 = vmatprep.subr.mxu0 0.0
  %1346 = vmatpush1.msra.mxu0 0.0
  %1347 = vmatprep.subr.mxu0 0.0
  %1348 = vmatpush1.msra.mxu0 0.0
  %1349 = vmatprep.subr.mxu0 0.0
  %1350 = vmatpush1.msra.mxu0 0.0
  %1351 = vmatprep.subr.mxu0 0.0
  %1352 = vmatpush1.msra.mxu0 0.0
  %1353 = vmatprep.subr.mxu0 0.0
  %1354 = vmatpush1.msra.mxu0 0.0
  %1355 = vmatprep.subr.mxu0 0.0
  %1356 = vmatpush1.msra.mxu0 0.0
  %1357 = vmatprep.subr.mxu0 0.0
  %1358 = vmatpush1.msra.mxu0 0.0
  %1359 = vmatprep.subr.mxu0 0.0
  %1360 = vmatpush1.msra.mxu0 0.0
  %1361 = vmatprep.subr.mxu0 0.0
  %1362 = vmatpush1.msra.mxu0 0.0
  %1363 = vmatprep.mubr.f32.mxu0 0.0
  %1364 = vmatmul.mubr.f32.gmra.mrb[0].mxu0 %v1266
  %v1365 = vpop.f32.mrb[0].mxu0
  %v1366 = vadd.f32 0.0, %v1365
  %v1367 = vpop.f32.mrb[0].mxu0
  %1368 = vmatprep.mubr.f32.mxu0 0.0
  %1369 = vmatmul.mubr.f32.gmra.mrb[0].mxu0 %v1267
  %v1370 = vpop.f32.mrb[0].mxu0
  %v1371 = vadd.f32 0.0, %v1370
  %v1372 = vpop.f32.mrb[0].mxu0
  %1373 = vmatprep.mubr.f32.mxu0 0.0
  %1374 = vmatmul.mubr.f32.gmra.mrb[0].mxu0 %v1268
  %v1375 = vpop.f32.mrb[0].mxu0
  %v1376 = vadd.f32 0.0, %v1375
  %v1377 = vpop.f32.mrb[0].mxu0
  %1378 = vmatprep.mubr.f32.mxu0 0.0
  %1379 = vmatmul.mubr.f32.gmra.mrb[0].mxu0 %v1269
  %v1380 = vpop.f32.mrb[0].mxu0
  %v1381 = vadd.f32 0.0, %v1380
  %v1382 = vpop.f32.mrb[0].mxu0
  %1383 = vmatprep.mubr.f32.mxu0 0.0
  %1384 = vmatmul.mubr.f32.gmra.mrb[0].mxu0 %v1270
  %v1385 = vpop.f32.mrb[0].mxu0
  %v1386 = vadd.f32 0.0, %v1385
  %v1387 = vpop.f32.mrb[0].mxu0
  %1388 = vmatprep.mubr.f32.mxu0 0.0
  %1389 = vmatmul.mubr.f32.gmra.mrb[0].mxu0 %v1271
  %v1390 = vpop.f32.mrb[0].mxu0
  %v1391 = vadd.f32 0.0, %v1390
  %v1392 = vpop.f32.mrb[0].mxu0
  %1393 = vmatprep.mubr.f32.mxu0 0.0
  %1394 = vmatmul.mubr.f32.gmra.mrb[0].mxu0 %v1272
  %v1395 = vpop.f32.mrb[0].mxu0
  %v1396 = vadd.f32 0.0, %v1395
  %v1397 = vpop.f32.mrb[0].mxu0
  %1398 = vmatprep.mubr.f32.mxu0 0.0
  %1399 = vmatmul.mubr.f32.gmra.mrb[0].mxu0 %v1273
  %v1400 = vpop.f32.mrb[0].mxu0
  %v1401 = vadd.f32 0.0, %v1400
  %v1402 = vpop.f32.mrb[0].mxu0
  %1403 = vmatprep.mubr.f32.mxu0 0.0
  %1404 = vmatmul.mubr.f32.gmra.mrb[0].mxu0 %v1274
  %v1405 = vpop.f32.mrb[0].mxu0
  %v1406 = vadd.f32 0.0, %v1405
  %v1407 = vpop.f32.mrb[0].mxu0
  %1408 = vmatprep.mubr.f32.mxu0 0.0
  %1409 = vmatmul.mubr.f32.gmra.mrb[0].mxu0 %v1275
  %v1410 = vpop.f32.mrb[0].mxu0
  %v1411 = vadd.f32 0.0, %v1410
  %v1412 = vpop.f32.mrb[0].mxu0
  %1413 = vmatprep.mubr.f32.mxu0 0.0
  %1414 = vmatmul.mubr.f32.gmra.mrb[0].mxu0 %v1276
  %v1415 = vpop.f32.mrb[0].mxu0
  %v1416 = vadd.f32 0.0, %v1415
  %v1417 = vpop.f32.mrb[0].mxu0
  %1418 = vmatprep.mubr.f32.mxu0 0.0
  %1419 = vmatmul.mubr.f32.gmra.mrb[0].mxu0 %v1277
  %v1420 = vpop.f32.mrb[0].mxu0
  %v1421 = vadd.f32 0.0, %v1420
  %v1422 = vpop.f32.mrb[0].mxu0
  %1423 = vmatprep.mubr.f32.mxu0 0.0
  %1424 = vmatmul.mubr.f32.gmra.mrb[0].mxu0 %v1278
  %v1425 = vpop.f32.mrb[0].mxu0
  %v1426 = vadd.f32 0.0, %v1425
  %v1427 = vpop.f32.mrb[0].mxu0
  %1428 = vmatprep.mubr.f32.mxu0 0.0
  %1429 = vmatmul.mubr.f32.gmra.mrb[0].mxu0 %v1279
  %v1430 = vpop.f32.mrb[0].mxu0
  %v1431 = vadd.f32 0.0, %v1430
  %v1432 = vpop.f32.mrb[0].mxu0
  %1433 = vmatprep.mubr.f32.mxu0 0.0
  %1434 = vmatmul.mubr.f32.gmra.mrb[0].mxu0 %v1280
  %v1435 = vpop.f32.mrb[0].mxu0
  %v1436 = vadd.f32 0.0, %v1435
  %v1437 = vpop.f32.mrb[0].mxu0
  %1438 = vmatprep.mubr.f32.mxu0 0.0
  %1439 = vmatmul.mubr.f32.gmra.mrb[0].mxu0 %v1281
  %v1440 = vpop.f32.mrb[0].mxu0
  %v1441 = vadd.f32 0.0, %v1440
  %v1442 = vpop.f32.mrb[0].mxu0
  %1443 = vdwg.mxu0
  %v1444 = vadd.f32 %v1250, %v1366
  %v1445 = vadd.f32 %v1251, %v1371
  %v1446 = vadd.f32 %v1252, %v1376
  %v1447 = vadd.f32 %v1253, %v1381
  %v1448 = vadd.f32 %v1254, %v1386
  %v1449 = vadd.f32 %v1255, %v1391
  %v1450 = vadd.f32 %v1256, %v1396
  %v1451 = vadd.f32 %v1257, %v1401
  %v1452 = vadd.f32 %v1258, %v1406
  %v1453 = vadd.f32 %v1259, %v1411
  %v1454 = vadd.f32 %v1260, %v1416
  %v1455 = vadd.f32 %v1261, %v1421
  %v1456 = vadd.f32 %v1262, %v1426
  %v1457 = vadd.f32 %v1263, %v1431
  %v1458 = vadd.f32 %v1264, %v1436
  %v1459 = vadd.f32 %v1265, %v1441
  %v1460 = vld [vmem:[%s319 + $0x2] sm:$0xff]
  %v1461 = vld [vmem:[%s319 + $0x12] sm:$0xff]
  %v1462 = vld [vmem:[%s319 + $0x22] sm:$0xff]
  %v1463 = vld [vmem:[%s319 + $0x32] sm:$0xff]
  %v1464 = vld [vmem:[%s319 + $0x42] sm:$0xff]
  %v1465 = vld [vmem:[%s319 + $0x52] sm:$0xff]
  %v1466 = vld [vmem:[%s319 + $0x62] sm:$0xff]
  %v1467 = vld [vmem:[%s319 + $0x72] sm:$0xff]
  %v1468 = vld [vmem:[%s319 + $0xa2] sm:$0xff]
  %v1469 = vld [vmem:[%s319 + $0xb2] sm:$0xff]
  %v1470 = vld [vmem:[%s319 + $0xc2] sm:$0xff]
  %v1471 = vld [vmem:[%s319 + $0xd2] sm:$0xff]
  %v1472 = vld [vmem:[%s319 + $0xe2] sm:$0xff]
  %v1473 = vld [vmem:[%s319 + $0xf2] sm:$0xff]
  %v1474 = vld [vmem:[%s319 + $0x102] sm:$0xff]
  %v1475 = vld [vmem:[%s319 + $0x112] sm:$0xff]
  %s1476 = scalar_lea.vmem %s4, 640
  %v1477 = vld [vmem:[%s1476] sm:$0xff]
  %v1478 = vld [vmem:[%s1476 + $0x8] sm:$0xff]
  %v1479 = vld [vmem:[%s1476 + $0x10] sm:$0xff]
  %v1480 = vld [vmem:[%s1476 + $0x18] sm:$0xff]
  %v1481 = vld [vmem:[%s1476 + $0x20] sm:$0xff]
  %v1482 = vld [vmem:[%s1476 + $0x28] sm:$0xff]
  %v1483 = vld [vmem:[%s1476 + $0x30] sm:$0xff]
  %v1484 = vld [vmem:[%s1476 + $0x38] sm:$0xff]
  %v1485 = vld [vmem:[%s1476 + $0x40] sm:$0xff]
  %v1486 = vld [vmem:[%s1476 + $0x48] sm:$0xff]
  %v1487 = vld [vmem:[%s1476 + $0x50] sm:$0xff]
  %v1488 = vld [vmem:[%s1476 + $0x58] sm:$0xff]
  %v1489 = vld [vmem:[%s1476 + $0x60] sm:$0xff]
  %v1490 = vld [vmem:[%s1476 + $0x68] sm:$0xff]
  %v1491 = vld [vmem:[%s1476 + $0x70] sm:$0xff]
  %v1492 = vld [vmem:[%s1476 + $0x78] sm:$0xff]
  %1493 = vmatprep.subr.mxu0 0.0
  %1494 = vmatpush1.msra.mxu0 %v1477
  %1495 = vmatprep.subr.mxu0 0.0
  %1496 = vmatpush1.msra.mxu0 %v1478
  %1497 = vmatprep.subr.mxu0 0.0
  %1498 = vmatpush1.msra.mxu0 %v1479
  %1499 = vmatprep.subr.mxu0 0.0
  %1500 = vmatpush1.msra.mxu0 %v1480
  %1501 = vmatprep.subr.mxu0 0.0
  %1502 = vmatpush1.msra.mxu0 %v1481
  %1503 = vmatprep.subr.mxu0 0.0
  %1504 = vmatpush1.msra.mxu0 %v1482
  %1505 = vmatprep.subr.mxu0 0.0
  %1506 = vmatpush1.msra.mxu0 %v1483
  %1507 = vmatprep.subr.mxu0 0.0
  %1508 = vmatpush1.msra.mxu0 %v1484
  %1509 = vmatprep.subr.mxu0 0.0
  %1510 = vmatpush1.msra.mxu0 %v1485
  %1511 = vmatprep.subr.mxu0 0.0
  %1512 = vmatpush1.msra.mxu0 %v1486
  %1513 = vmatprep.subr.mxu0 0.0
  %1514 = vmatpush1.msra.mxu0 %v1487
  %1515 = vmatprep.subr.mxu0 0.0
  %1516 = vmatpush1.msra.mxu0 %v1488
  %1517 = vmatprep.subr.mxu0 0.0
  %1518 = vmatpush1.msra.mxu0 %v1489
  %1519 = vmatprep.subr.mxu0 0.0
  %1520 = vmatpush1.msra.mxu0 %v1490
  %1521 = vmatprep.subr.mxu0 0.0
  %1522 = vmatpush1.msra.mxu0 %v1491
  %1523 = vmatprep.subr.mxu0 0.0
  %1524 = vmatpush1.msra.mxu0 %v1492
  %1525 = vmatprep.subr.mxu0 0.0
  %1526 = vmatpush1.msra.mxu0 0.0
  %1527 = vmatprep.subr.mxu0 0.0
  %1528 = vmatpush1.msra.mxu0 0.0
  %1529 = vmatprep.subr.mxu0 0.0
  %1530 = vmatpush1.msra.mxu0 0.0
  %1531 = vmatprep.subr.mxu0 0.0
  %1532 = vmatpush1.msra.mxu0 0.0
  %1533 = vmatprep.subr.mxu0 0.0
  %1534 = vmatpush1.msra.mxu0 0.0
  %1535 = vmatprep.subr.mxu0 0.0
  %1536 = vmatpush1.msra.mxu0 0.0
  %1537 = vmatprep.subr.mxu0 0.0
  %1538 = vmatpush1.msra.mxu0 0.0
  %1539 = vmatprep.subr.mxu0 0.0
  %1540 = vmatpush1.msra.mxu0 0.0
  %1541 = vmatprep.subr.mxu0 0.0
  %1542 = vmatpush1.msra.mxu0 0.0
  %1543 = vmatprep.subr.mxu0 0.0
  %1544 = vmatpush1.msra.mxu0 0.0
  %1545 = vmatprep.subr.mxu0 0.0
  %1546 = vmatpush1.msra.mxu0 0.0
  %1547 = vmatprep.subr.mxu0 0.0
  %1548 = vmatpush1.msra.mxu0 0.0
  %1549 = vmatprep.subr.mxu0 0.0
  %1550 = vmatpush1.msra.mxu0 0.0
  %1551 = vmatprep.subr.mxu0 0.0
  %1552 = vmatpush1.msra.mxu0 0.0
  %1553 = vmatprep.subr.mxu0 0.0
  %1554 = vmatpush1.msra.mxu0 0.0
  %1555 = vmatprep.subr.mxu0 0.0
  %1556 = vmatpush1.msra.mxu0 0.0
  %1557 = vmatprep.mubr.f32.mxu0 0.0
  %1558 = vmatmul.mubr.f32.gmra.mrb[0].mxu0 %v1460
  %v1559 = vpop.f32.mrb[0].mxu0
  %v1560 = vadd.f32 0.0, %v1559
  %v1561 = vpop.f32.mrb[0].mxu0
  %1562 = vmatprep.mubr.f32.mxu0 0.0
  %1563 = vmatmul.mubr.f32.gmra.mrb[0].mxu0 %v1461
  %v1564 = vpop.f32.mrb[0].mxu0
  %v1565 = vadd.f32 0.0, %v1564
  %v1566 = vpop.f32.mrb[0].mxu0
  %1567 = vmatprep.mubr.f32.mxu0 0.0
  %1568 = vmatmul.mubr.f32.gmra.mrb[0].mxu0 %v1462
  %v1569 = vpop.f32.mrb[0].mxu0
  %v1570 = vadd.f32 0.0, %v1569
  %v1571 = vpop.f32.mrb[0].mxu0
  %1572 = vmatprep.mubr.f32.mxu0 0.0
  %1573 = vmatmul.mubr.f32.gmra.mrb[0].mxu0 %v1463
  %v1574 = vpop.f32.mrb[0].mxu0
  %v1575 = vadd.f32 0.0, %v1574
  %v1576 = vpop.f32.mrb[0].mxu0
  %1577 = vmatprep.mubr.f32.mxu0 0.0
  %1578 = vmatmul.mubr.f32.gmra.mrb[0].mxu0 %v1464
  %v1579 = vpop.f32.mrb[0].mxu0
  %v1580 = vadd.f32 0.0, %v1579
  %v1581 = vpop.f32.mrb[0].mxu0
  %1582 = vmatprep.mubr.f32.mxu0 0.0
  %1583 = vmatmul.mubr.f32.gmra.mrb[0].mxu0 %v1465
  %v1584 = vpop.f32.mrb[0].mxu0
  %v1585 = vadd.f32 0.0, %v1584
  %v1586 = vpop.f32.mrb[0].mxu0
  %1587 = vmatprep.mubr.f32.mxu0 0.0
  %1588 = vmatmul.mubr.f32.gmra.mrb[0].mxu0 %v1466
  %v1589 = vpop.f32.mrb[0].mxu0
  %v1590 = vadd.f32 0.0, %v1589
  %v1591 = vpop.f32.mrb[0].mxu0
  %1592 = vmatprep.mubr.f32.mxu0 0.0
  %1593 = vmatmul.mubr.f32.gmra.mrb[0].mxu0 %v1467
  %v1594 = vpop.f32.mrb[0].mxu0
  %v1595 = vadd.f32 0.0, %v1594
  %v1596 = vpop.f32.mrb[0].mxu0
  %1597 = vmatprep.mubr.f32.mxu0 0.0
  %1598 = vmatmul.mubr.f32.gmra.mrb[0].mxu0 %v1468
  %v1599 = vpop.f32.mrb[0].mxu0
  %v1600 = vadd.f32 0.0, %v1599
  %v1601 = vpop.f32.mrb[0].mxu0
  %1602 = vmatprep.mubr.f32.mxu0 0.0
  %1603 = vmatmul.mubr.f32.gmra.mrb[0].mxu0 %v1469
  %v1604 = vpop.f32.mrb[0].mxu0
  %v1605 = vadd.f32 0.0, %v1604
  %v1606 = vpop.f32.mrb[0].mxu0
  %1607 = vmatprep.mubr.f32.mxu0 0.0
  %1608 = vmatmul.mubr.f32.gmra.mrb[0].mxu0 %v1470
  %v1609 = vpop.f32.mrb[0].mxu0
  %v1610 = vadd.f32 0.0, %v1609
  %v1611 = vpop.f32.mrb[0].mxu0
  %1612 = vmatprep.mubr.f32.mxu0 0.0
  %1613 = vmatmul.mubr.f32.gmra.mrb[0].mxu0 %v1471
  %v1614 = vpop.f32.mrb[0].mxu0
  %v1615 = vadd.f32 0.0, %v1614
  %v1616 = vpop.f32.mrb[0].mxu0
  %1617 = vmatprep.mubr.f32.mxu0 0.0
  %1618 = vmatmul.mubr.f32.gmra.mrb[0].mxu0 %v1472
  %v1619 = vpop.f32.mrb[0].mxu0
  %v1620 = vadd.f32 0.0, %v1619
  %v1621 = vpop.f32.mrb[0].mxu0
  %1622 = vmatprep.mubr.f32.mxu0 0.0
  %1623 = vmatmul.mubr.f32.gmra.mrb[0].mxu0 %v1473
  %v1624 = vpop.f32.mrb[0].mxu0
  %v1625 = vadd.f32 0.0, %v1624
  %v1626 = vpop.f32.mrb[0].mxu0
  %1627 = vmatprep.mubr.f32.mxu0 0.0
  %1628 = vmatmul.mubr.f32.gmra.mrb[0].mxu0 %v1474
  %v1629 = vpop.f32.mrb[0].mxu0
  %v1630 = vadd.f32 0.0, %v1629
  %v1631 = vpop.f32.mrb[0].mxu0
  %1632 = vmatprep.mubr.f32.mxu0 0.0
  %1633 = vmatmul.mubr.f32.gmra.mrb[0].mxu0 %v1475
  %v1634 = vpop.f32.mrb[0].mxu0
  %v1635 = vadd.f32 0.0, %v1634
  %v1636 = vpop.f32.mrb[0].mxu0
  %1637 = vdwg.mxu0
  %v1638 = vadd.f32 %v1444, %v1560
  %v1639 = vadd.f32 %v1445, %v1565
  %v1640 = vadd.f32 %v1446, %v1570
  %v1641 = vadd.f32 %v1447, %v1575
  %v1642 = vadd.f32 %v1448, %v1580
  %v1643 = vadd.f32 %v1449, %v1585
  %v1644 = vadd.f32 %v1450, %v1590
  %v1645 = vadd.f32 %v1451, %v1595
  %v1646 = vadd.f32 %v1452, %v1600
  %v1647 = vadd.f32 %v1453, %v1605
  %v1648 = vadd.f32 %v1454, %v1610
  %v1649 = vadd.f32 %v1455, %v1615
  %v1650 = vadd.f32 %v1456, %v1620
  %v1651 = vadd.f32 %v1457, %v1625
  %v1652 = vadd.f32 %v1458, %v1630
  %v1653 = vadd.f32 %v1459, %v1635
  %s1654 = scalar_lea.vmem [#allocation2], 32
  %v1655 = vld [vmem:[%s1654] sm:$0xff]
  %v1656 = vld [vmem:[%s1654 + $0x10] sm:$0xff]
  %v1657 = vld [vmem:[%s1654 + $0x20] sm:$0xff]
  %v1658 = vld [vmem:[%s1654 + $0x30] sm:$0xff]
  %v1659 = vld [vmem:[%s1654 + $0x40] sm:$0xff]
  %v1660 = vld [vmem:[%s1654 + $0x50] sm:$0xff]
  %v1661 = vld [vmem:[%s1654 + $0x60] sm:$0xff]
  %v1662 = vld [vmem:[%s1654 + $0x70] sm:$0xff]
  %v1663 = vld [vmem:[%s1654 + $0xa0] sm:$0xff]
  %v1664 = vld [vmem:[%s1654 + $0xb0] sm:$0xff]
  %v1665 = vld [vmem:[%s1654 + $0xc0] sm:$0xff]
  %v1666 = vld [vmem:[%s1654 + $0xd0] sm:$0xff]
  %v1667 = vld [vmem:[%s1654 + $0xe0] sm:$0xff]
  %v1668 = vld [vmem:[%s1654 + $0xf0] sm:$0xff]
  %v1669 = vld [vmem:[%s1654 + $0x100] sm:$0xff]
  %v1670 = vld [vmem:[%s1654 + $0x110] sm:$0xff]
  %s1671 = scalar_lea.vmem %s4, 768
  %v1672 = vld [vmem:[%s1671] sm:$0xff]
  %v1673 = vld [vmem:[%s1671 + $0x8] sm:$0xff]
  %v1674 = vld [vmem:[%s1671 + $0x10] sm:$0xff]
  %v1675 = vld [vmem:[%s1671 + $0x18] sm:$0xff]
  %v1676 = vld [vmem:[%s1671 + $0x20] sm:$0xff]
  %v1677 = vld [vmem:[%s1671 + $0x28] sm:$0xff]
  %v1678 = vld [vmem:[%s1671 + $0x30] sm:$0xff]
  %v1679 = vld [vmem:[%s1671 + $0x38] sm:$0xff]
  %v1680 = vld [vmem:[%s1671 + $0x40] sm:$0xff]
  %v1681 = vld [vmem:[%s1671 + $0x48] sm:$0xff]
  %v1682 = vld [vmem:[%s1671 + $0x50] sm:$0xff]
  %v1683 = vld [vmem:[%s1671 + $0x58] sm:$0xff]
  %v1684 = vld [vmem:[%s1671 + $0x60] sm:$0xff]
  %v1685 = vld [vmem:[%s1671 + $0x68] sm:$0xff]
  %v1686 = vld [vmem:[%s1671 + $0x70] sm:$0xff]
  %v1687 = vld [vmem:[%s1671 + $0x78] sm:$0xff]
  %1688 = vmatprep.subr.mxu0 0.0
  %1689 = vmatpush1.msra.mxu0 %v1672
  %1690 = vmatprep.subr.mxu0 0.0
  %1691 = vmatpush1.msra.mxu0 %v1673
  %1692 = vmatprep.subr.mxu0 0.0
  %1693 = vmatpush1.msra.mxu0 %v1674
  %1694 = vmatprep.subr.mxu0 0.0
  %1695 = vmatpush1.msra.mxu0 %v1675
  %1696 = vmatprep.subr.mxu0 0.0
  %1697 = vmatpush1.msra.mxu0 %v1676
  %1698 = vmatprep.subr.mxu0 0.0
  %1699 = vmatpush1.msra.mxu0 %v1677
  %1700 = vmatprep.subr.mxu0 0.0
  %1701 = vmatpush1.msra.mxu0 %v1678
  %1702 = vmatprep.subr.mxu0 0.0
  %1703 = vmatpush1.msra.mxu0 %v1679
  %1704 = vmatprep.subr.mxu0 0.0
  %1705 = vmatpush1.msra.mxu0 %v1680
  %1706 = vmatprep.subr.mxu0 0.0
  %1707 = vmatpush1.msra.mxu0 %v1681
  %1708 = vmatprep.subr.mxu0 0.0
  %1709 = vmatpush1.msra.mxu0 %v1682
  %1710 = vmatprep.subr.mxu0 0.0
  %1711 = vmatpush1.msra.mxu0 %v1683
  %1712 = vmatprep.subr.mxu0 0.0
  %1713 = vmatpush1.msra.mxu0 %v1684
  %1714 = vmatprep.subr.mxu0 0.0
  %1715 = vmatpush1.msra.mxu0 %v1685
  %1716 = vmatprep.subr.mxu0 0.0
  %1717 = vmatpush1.msra.mxu0 %v1686
  %1718 = vmatprep.subr.mxu0 0.0
  %1719 = vmatpush1.msra.mxu0 %v1687
  %1720 = vmatprep.subr.mxu0 0.0
  %1721 = vmatpush1.msra.mxu0 0.0
  %1722 = vmatprep.subr.mxu0 0.0
  %1723 = vmatpush1.msra.mxu0 0.0
  %1724 = vmatprep.subr.mxu0 0.0
  %1725 = vmatpush1.msra.mxu0 0.0
  %1726 = vmatprep.subr.mxu0 0.0
  %1727 = vmatpush1.msra.mxu0 0.0
  %1728 = vmatprep.subr.mxu0 0.0
  %1729 = vmatpush1.msra.mxu0 0.0
  %1730 = vmatprep.subr.mxu0 0.0
  %1731 = vmatpush1.msra.mxu0 0.0
  %1732 = vmatprep.subr.mxu0 0.0
  %1733 = vmatpush1.msra.mxu0 0.0
  %1734 = vmatprep.subr.mxu0 0.0
  %1735 = vmatpush1.msra.mxu0 0.0
  %1736 = vmatprep.subr.mxu0 0.0
  %1737 = vmatpush1.msra.mxu0 0.0
  %1738 = vmatprep.subr.mxu0 0.0
  %1739 = vmatpush1.msra.mxu0 0.0
  %1740 = vmatprep.subr.mxu0 0.0
  %1741 = vmatpush1.msra.mxu0 0.0
  %1742 = vmatprep.subr.mxu0 0.0
  %1743 = vmatpush1.msra.mxu0 0.0
  %1744 = vmatprep.subr.mxu0 0.0
  %1745 = vmatpush1.msra.mxu0 0.0
  %1746 = vmatprep.subr.mxu0 0.0
  %1747 = vmatpush1.msra.mxu0 0.0
  %1748 = vmatprep.subr.mxu0 0.0
  %1749 = vmatpush1.msra.mxu0 0.0
  %1750 = vmatprep.subr.mxu0 0.0
  %1751 = vmatpush1.msra.mxu0 0.0
  %1752 = vmatprep.mubr.f32.mxu0 0.0
  %1753 = vmatmul.mubr.f32.gmra.mrb[0].mxu0 %v1655
  %v1754 = vpop.f32.mrb[0].mxu0
  %v1755 = vadd.f32 0.0, %v1754
  %v1756 = vpop.f32.mrb[0].mxu0
  %1757 = vmatprep.mubr.f32.mxu0 0.0
  %1758 = vmatmul.mubr.f32.gmra.mrb[0].mxu0 %v1656
  %v1759 = vpop.f32.mrb[0].mxu0
  %v1760 = vadd.f32 0.0, %v1759
  %v1761 = vpop.f32.mrb[0].mxu0
  %1762 = vmatprep.mubr.f32.mxu0 0.0
  %1763 = vmatmul.mubr.f32.gmra.mrb[0].mxu0 %v1657
  %v1764 = vpop.f32.mrb[0].mxu0
  %v1765 = vadd.f32 0.0, %v1764
  %v1766 = vpop.f32.mrb[0].mxu0
  %1767 = vmatprep.mubr.f32.mxu0 0.0
  %1768 = vmatmul.mubr.f32.gmra.mrb[0].mxu0 %v1658
  %v1769 = vpop.f32.mrb[0].mxu0
  %v1770 = vadd.f32 0.0, %v1769
  %v1771 = vpop.f32.mrb[0].mxu0
  %1772 = vmatprep.mubr.f32.mxu0 0.0
  %1773 = vmatmul.mubr.f32.gmra.mrb[0].mxu0 %v1659
  %v1774 = vpop.f32.mrb[0].mxu0
  %v1775 = vadd.f32 0.0, %v1774
  %v1776 = vpop.f32.mrb[0].mxu0
  %1777 = vmatprep.mubr.f32.mxu0 0.0
  %1778 = vmatmul.mubr.f32.gmra.mrb[0].mxu0 %v1660
  %v1779 = vpop.f32.mrb[0].mxu0
  %v1780 = vadd.f32 0.0, %v1779
  %v1781 = vpop.f32.mrb[0].mxu0
  %1782 = vmatprep.mubr.f32.mxu0 0.0
  %1783 = vmatmul.mubr.f32.gmra.mrb[0].mxu0 %v1661
  %v1784 = vpop.f32.mrb[0].mxu0
  %v1785 = vadd.f32 0.0, %v1784
  %v1786 = vpop.f32.mrb[0].mxu0
  %1787 = vmatprep.mubr.f32.mxu0 0.0
  %1788 = vmatmul.mubr.f32.gmra.mrb[0].mxu0 %v1662
  %v1789 = vpop.f32.mrb[0].mxu0
  %v1790 = vadd.f32 0.0, %v1789
  %v1791 = vpop.f32.mrb[0].mxu0
  %1792 = vmatprep.mubr.f32.mxu0 0.0
  %1793 = vmatmul.mubr.f32.gmra.mrb[0].mxu0 %v1663
  %v1794 = vpop.f32.mrb[0].mxu0
  %v1795 = vadd.f32 0.0, %v1794
  %v1796 = vpop.f32.mrb[0].mxu0
  %1797 = vmatprep.mubr.f32.mxu0 0.0
  %1798 = vmatmul.mubr.f32.gmra.mrb[0].mxu0 %v1664
  %v1799 = vpop.f32.mrb[0].mxu0
  %v1800 = vadd.f32 0.0, %v1799
  %v1801 = vpop.f32.mrb[0].mxu0
  %1802 = vmatprep.mubr.f32.mxu0 0.0
  %1803 = vmatmul.mubr.f32.gmra.mrb[0].mxu0 %v1665
  %v1804 = vpop.f32.mrb[0].mxu0
  %v1805 = vadd.f32 0.0, %v1804
  %v1806 = vpop.f32.mrb[0].mxu0
  %1807 = vmatprep.mubr.f32.mxu0 0.0
  %1808 = vmatmul.mubr.f32.gmra.mrb[0].mxu0 %v1666
  %v1809 = vpop.f32.mrb[0].mxu0
  %v1810 = vadd.f32 0.0, %v1809
  %v1811 = vpop.f32.mrb[0].mxu0
  %1812 = vmatprep.mubr.f32.mxu0 0.0
  %1813 = vmatmul.mubr.f32.gmra.mrb[0].mxu0 %v1667
  %v1814 = vpop.f32.mrb[0].mxu0
  %v1815 = vadd.f32 0.0, %v1814
  %v1816 = vpop.f32.mrb[0].mxu0
  %1817 = vmatprep.mubr.f32.mxu0 0.0
  %1818 = vmatmul.mubr.f32.gmra.mrb[0].mxu0 %v1668
  %v1819 = vpop.f32.mrb[0].mxu0
  %v1820 = vadd.f32 0.0, %v1819
  %v1821 = vpop.f32.mrb[0].mxu0
  %1822 = vmatprep.mubr.f32.mxu0 0.0
  %1823 = vmatmul.mubr.f32.gmra.mrb[0].mxu0 %v1669
  %v1824 = vpop.f32.mrb[0].mxu0
  %v1825 = vadd.f32 0.0, %v1824
  %v1826 = vpop.f32.mrb[0].mxu0
  %1827 = vmatprep.mubr.f32.mxu0 0.0
  %1828 = vmatmul.mubr.f32.gmra.mrb[0].mxu0 %v1670
  %v1829 = vpop.f32.mrb[0].mxu0
  %v1830 = vadd.f32 0.0, %v1829
  %v1831 = vpop.f32.mrb[0].mxu0
  %1832 = vdwg.mxu0
  %v1833 = vadd.f32 %v1638, %v1755
  %v1834 = vadd.f32 %v1639, %v1760
  %v1835 = vadd.f32 %v1640, %v1765
  %v1836 = vadd.f32 %v1641, %v1770
  %v1837 = vadd.f32 %v1642, %v1775
  %v1838 = vadd.f32 %v1643, %v1780
  %v1839 = vadd.f32 %v1644, %v1785
  %v1840 = vadd.f32 %v1645, %v1790
  %v1841 = vadd.f32 %v1646, %v1795
  %v1842 = vadd.f32 %v1647, %v1800
  %v1843 = vadd.f32 %v1648, %v1805
  %v1844 = vadd.f32 %v1649, %v1810
  %v1845 = vadd.f32 %v1650, %v1815
  %v1846 = vadd.f32 %v1651, %v1820
  %v1847 = vadd.f32 %v1652, %v1825
  %v1848 = vadd.f32 %v1653, %v1830
  %v1849 = vld [vmem:[%s1654 + $0x1] sm:$0xff]
  %v1850 = vld [vmem:[%s1654 + $0x11] sm:$0xff]
  %v1851 = vld [vmem:[%s1654 + $0x21] sm:$0xff]
  %v1852 = vld [vmem:[%s1654 + $0x31] sm:$0xff]
  %v1853 = vld [vmem:[%s1654 + $0x41] sm:$0xff]
  %v1854 = vld [vmem:[%s1654 + $0x51] sm:$0xff]
  %v1855 = vld [vmem:[%s1654 + $0x61] sm:$0xff]
  %v1856 = vld [vmem:[%s1654 + $0x71] sm:$0xff]
  %v1857 = vld [vmem:[%s1654 + $0xa1] sm:$0xff]
  %v1858 = vld [vmem:[%s1654 + $0xb1] sm:$0xff]
  %v1859 = vld [vmem:[%s1654 + $0xc1] sm:$0xff]
  %v1860 = vld [vmem:[%s1654 + $0xd1] sm:$0xff]
  %v1861 = vld [vmem:[%s1654 + $0xe1] sm:$0xff]
  %v1862 = vld [vmem:[%s1654 + $0xf1] sm:$0xff]
  %v1863 = vld [vmem:[%s1654 + $0x101] sm:$0xff]
  %v1864 = vld [vmem:[%s1654 + $0x111] sm:$0xff]
  %s1865 = scalar_lea.vmem %s4, 896
  %v1866 = vld [vmem:[%s1865] sm:$0xff]
  %v1867 = vld [vmem:[%s1865 + $0x8] sm:$0xff]
  %v1868 = vld [vmem:[%s1865 + $0x10] sm:$0xff]
  %v1869 = vld [vmem:[%s1865 + $0x18] sm:$0xff]
  %v1870 = vld [vmem:[%s1865 + $0x20] sm:$0xff]
  %v1871 = vld [vmem:[%s1865 + $0x28] sm:$0xff]
  %v1872 = vld [vmem:[%s1865 + $0x30] sm:$0xff]
  %v1873 = vld [vmem:[%s1865 + $0x38] sm:$0xff]
  %v1874 = vld [vmem:[%s1865 + $0x40] sm:$0xff]
  %v1875 = vld [vmem:[%s1865 + $0x48] sm:$0xff]
  %v1876 = vld [vmem:[%s1865 + $0x50] sm:$0xff]
  %v1877 = vld [vmem:[%s1865 + $0x58] sm:$0xff]
  %v1878 = vld [vmem:[%s1865 + $0x60] sm:$0xff]
  %v1879 = vld [vmem:[%s1865 + $0x68] sm:$0xff]
  %v1880 = vld [vmem:[%s1865 + $0x70] sm:$0xff]
  %v1881 = vld [vmem:[%s1865 + $0x78] sm:$0xff]
  %1882 = vmatprep.subr.mxu0 0.0
  %1883 = vmatpush1.msra.mxu0 %v1866
  %1884 = vmatprep.subr.mxu0 0.0
  %1885 = vmatpush1.msra.mxu0 %v1867
  %1886 = vmatprep.subr.mxu0 0.0
  %1887 = vmatpush1.msra.mxu0 %v1868
  %1888 = vmatprep.subr.mxu0 0.0
  %1889 = vmatpush1.msra.mxu0 %v1869
  %1890 = vmatprep.subr.mxu0 0.0
  %1891 = vmatpush1.msra.mxu0 %v1870
  %1892 = vmatprep.subr.mxu0 0.0
  %1893 = vmatpush1.msra.mxu0 %v1871
  %1894 = vmatprep.subr.mxu0 0.0
  %1895 = vmatpush1.msra.mxu0 %v1872
  %1896 = vmatprep.subr.mxu0 0.0
  %1897 = vmatpush1.msra.mxu0 %v1873
  %1898 = vmatprep.subr.mxu0 0.0
  %1899 = vmatpush1.msra.mxu0 %v1874
  %1900 = vmatprep.subr.mxu0 0.0
  %1901 = vmatpush1.msra.mxu0 %v1875
  %1902 = vmatprep.subr.mxu0 0.0
  %1903 = vmatpush1.msra.mxu0 %v1876
  %1904 = vmatprep.subr.mxu0 0.0
  %1905 = vmatpush1.msra.mxu0 %v1877
  %1906 = vmatprep.subr.mxu0 0.0
  %1907 = vmatpush1.msra.mxu0 %v1878
  %1908 = vmatprep.subr.mxu0 0.0
  %1909 = vmatpush1.msra.mxu0 %v1879
  %1910 = vmatprep.subr.mxu0 0.0
  %1911 = vmatpush1.msra.mxu0 %v1880
  %1912 = vmatprep.subr.mxu0 0.0
  %1913 = vmatpush1.msra.mxu0 %v1881
  %1914 = vmatprep.subr.mxu0 0.0
  %1915 = vmatpush1.msra.mxu0 0.0
  %1916 = vmatprep.subr.mxu0 0.0
  %1917 = vmatpush1.msra.mxu0 0.0
  %1918 = vmatprep.subr.mxu0 0.0
  %1919 = vmatpush1.msra.mxu0 0.0
  %1920 = vmatprep.subr.mxu0 0.0
  %1921 = vmatpush1.msra.mxu0 0.0
  %1922 = vmatprep.subr.mxu0 0.0
  %1923 = vmatpush1.msra.mxu0 0.0
  %1924 = vmatprep.subr.mxu0 0.0
  %1925 = vmatpush1.msra.mxu0 0.0
  %1926 = vmatprep.subr.mxu0 0.0
  %1927 = vmatpush1.msra.mxu0 0.0
  %1928 = vmatprep.subr.mxu0 0.0
  %1929 = vmatpush1.msra.mxu0 0.0
  %1930 = vmatprep.subr.mxu0 0.0
  %1931 = vmatpush1.msra.mxu0 0.0
  %1932 = vmatprep.subr.mxu0 0.0
  %1933 = vmatpush1.msra.mxu0 0.0
  %1934 = vmatprep.subr.mxu0 0.0
  %1935 = vmatpush1.msra.mxu0 0.0
  %1936 = vmatprep.subr.mxu0 0.0
  %1937 = vmatpush1.msra.mxu0 0.0
  %1938 = vmatprep.subr.mxu0 0.0
  %1939 = vmatpush1.msra.mxu0 0.0
  %1940 = vmatprep.subr.mxu0 0.0
  %1941 = vmatpush1.msra.mxu0 0.0
  %1942 = vmatprep.subr.mxu0 0.0
  %1943 = vmatpush1.msra.mxu0 0.0
  %1944 = vmatprep.subr.mxu0 0.0
  %1945 = vmatpush1.msra.mxu0 0.0
  %1946 = vmatprep.mubr.f32.mxu0 0.0
  %1947 = vmatmul.mubr.f32.gmra.mrb[0].mxu0 %v1849
  %v1948 = vpop.f32.mrb[0].mxu0
  %v1949 = vadd.f32 0.0, %v1948
  %v1950 = vpop.f32.mrb[0].mxu0
  %1951 = vmatprep.mubr.f32.mxu0 0.0
  %1952 = vmatmul.mubr.f32.gmra.mrb[0].mxu0 %v1850
  %v1953 = vpop.f32.mrb[0].mxu0
  %v1954 = vadd.f32 0.0, %v1953
  %v1955 = vpop.f32.mrb[0].mxu0
  %1956 = vmatprep.mubr.f32.mxu0 0.0
  %1957 = vmatmul.mubr.f32.gmra.mrb[0].mxu0 %v1851
  %v1958 = vpop.f32.mrb[0].mxu0
  %v1959 = vadd.f32 0.0, %v1958
  %v1960 = vpop.f32.mrb[0].mxu0
  %1961 = vmatprep.mubr.f32.mxu0 0.0
  %1962 = vmatmul.mubr.f32.gmra.mrb[0].mxu0 %v1852
  %v1963 = vpop.f32.mrb[0].mxu0
  %v1964 = vadd.f32 0.0, %v1963
  %v1965 = vpop.f32.mrb[0].mxu0
  %1966 = vmatprep.mubr.f32.mxu0 0.0
  %1967 = vmatmul.mubr.f32.gmra.mrb[0].mxu0 %v1853
  %v1968 = vpop.f32.mrb[0].mxu0
  %v1969 = vadd.f32 0.0, %v1968
  %v1970 = vpop.f32.mrb[0].mxu0
  %1971 = vmatprep.mubr.f32.mxu0 0.0
  %1972 = vmatmul.mubr.f32.gmra.mrb[0].mxu0 %v1854
  %v1973 = vpop.f32.mrb[0].mxu0
  %v1974 = vadd.f32 0.0, %v1973
  %v1975 = vpop.f32.mrb[0].mxu0
  %1976 = vmatprep.mubr.f32.mxu0 0.0
  %1977 = vmatmul.mubr.f32.gmra.mrb[0].mxu0 %v1855
  %v1978 = vpop.f32.mrb[0].mxu0
  %v1979 = vadd.f32 0.0, %v1978
  %v1980 = vpop.f32.mrb[0].mxu0
  %1981 = vmatprep.mubr.f32.mxu0 0.0
  %1982 = vmatmul.mubr.f32.gmra.mrb[0].mxu0 %v1856
  %v1983 = vpop.f32.mrb[0].mxu0
  %v1984 = vadd.f32 0.0, %v1983
  %v1985 = vpop.f32.mrb[0].mxu0
  %1986 = vmatprep.mubr.f32.mxu0 0.0
  %1987 = vmatmul.mubr.f32.gmra.mrb[0].mxu0 %v1857
  %v1988 = vpop.f32.mrb[0].mxu0
  %v1989 = vadd.f32 0.0, %v1988
  %v1990 = vpop.f32.mrb[0].mxu0
  %1991 = vmatprep.mubr.f32.mxu0 0.0
  %1992 = vmatmul.mubr.f32.gmra.mrb[0].mxu0 %v1858
  %v1993 = vpop.f32.mrb[0].mxu0
  %v1994 = vadd.f32 0.0, %v1993
  %v1995 = vpop.f32.mrb[0].mxu0
  %1996 = vmatprep.mubr.f32.mxu0 0.0
  %1997 = vmatmul.mubr.f32.gmra.mrb[0].mxu0 %v1859
  %v1998 = vpop.f32.mrb[0].mxu0
  %v1999 = vadd.f32 0.0, %v1998
  %v2000 = vpop.f32.mrb[0].mxu0
  %2001 = vmatprep.mubr.f32.mxu0 0.0
  %2002 = vmatmul.mubr.f32.gmra.mrb[0].mxu0 %v1860
  %v2003 = vpop.f32.mrb[0].mxu0
  %v2004 = vadd.f32 0.0, %v2003
  %v2005 = vpop.f32.mrb[0].mxu0
  %2006 = vmatprep.mubr.f32.mxu0 0.0
  %2007 = vmatmul.mubr.f32.gmra.mrb[0].mxu0 %v1861
  %v2008 = vpop.f32.mrb[0].mxu0
  %v2009 = vadd.f32 0.0, %v2008
  %v2010 = vpop.f32.mrb[0].mxu0
  %2011 = vmatprep.mubr.f32.mxu0 0.0
  %2012 = vmatmul.mubr.f32.gmra.mrb[0].mxu0 %v1862
  %v2013 = vpop.f32.mrb[0].mxu0
  %v2014 = vadd.f32 0.0, %v2013
  %v2015 = vpop.f32.mrb[0].mxu0
  %2016 = vmatprep.mubr.f32.mxu0 0.0
  %2017 = vmatmul.mubr.f32.gmra.mrb[0].mxu0 %v1863
  %v2018 = vpop.f32.mrb[0].mxu0
  %v2019 = vadd.f32 0.0, %v2018
  %v2020 = vpop.f32.mrb[0].mxu0
  %2021 = vmatprep.mubr.f32.mxu0 0.0
  %2022 = vmatmul.mubr.f32.gmra.mrb[0].mxu0 %v1864
  %v2023 = vpop.f32.mrb[0].mxu0
  %v2024 = vadd.f32 0.0, %v2023
  %v2025 = vpop.f32.mrb[0].mxu0
  %2026 = vdwg.mxu0
  %v2027 = vadd.f32 %v1833, %v1949
  %v2028 = vadd.f32 %v1834, %v1954
  %v2029 = vadd.f32 %v1835, %v1959
  %v2030 = vadd.f32 %v1836, %v1964
  %v2031 = vadd.f32 %v1837, %v1969
  %v2032 = vadd.f32 %v1838, %v1974
  %v2033 = vadd.f32 %v1839, %v1979
  %v2034 = vadd.f32 %v1840, %v1984
  %v2035 = vadd.f32 %v1841, %v1989
  %v2036 = vadd.f32 %v1842, %v1994
  %v2037 = vadd.f32 %v1843, %v1999
  %v2038 = vadd.f32 %v1844, %v2004
  %v2039 = vadd.f32 %v1845, %v2009
  %v2040 = vadd.f32 %v1846, %v2014
  %v2041 = vadd.f32 %v1847, %v2019
  %v2042 = vadd.f32 %v1848, %v2024
  %v2043 = vld [vmem:[%s1654 + $0x2] sm:$0xff]
  %v2044 = vld [vmem:[%s1654 + $0x12] sm:$0xff]
  %v2045 = vld [vmem:[%s1654 + $0x22] sm:$0xff]
  %v2046 = vld [vmem:[%s1654 + $0x32] sm:$0xff]
  %v2047 = vld [vmem:[%s1654 + $0x42] sm:$0xff]
  %v2048 = vld [vmem:[%s1654 + $0x52] sm:$0xff]
  %v2049 = vld [vmem:[%s1654 + $0x62] sm:$0xff]
  %v2050 = vld [vmem:[%s1654 + $0x72] sm:$0xff]
  %v2051 = vld [vmem:[%s1654 + $0xa2] sm:$0xff]
  %v2052 = vld [vmem:[%s1654 + $0xb2] sm:$0xff]
  %v2053 = vld [vmem:[%s1654 + $0xc2] sm:$0xff]
  %v2054 = vld [vmem:[%s1654 + $0xd2] sm:$0xff]
  %v2055 = vld [vmem:[%s1654 + $0xe2] sm:$0xff]
  %v2056 = vld [vmem:[%s1654 + $0xf2] sm:$0xff]
  %v2057 = vld [vmem:[%s1654 + $0x102] sm:$0xff]
  %v2058 = vld [vmem:[%s1654 + $0x112] sm:$0xff]
  %s2059 = scalar_lea.vmem %s4, 1024
  %v2060 = vld [vmem:[%s2059] sm:$0xff]
  %v2061 = vld [vmem:[%s2059 + $0x8] sm:$0xff]
  %v2062 = vld [vmem:[%s2059 + $0x10] sm:$0xff]
  %v2063 = vld [vmem:[%s2059 + $0x18] sm:$0xff]
  %v2064 = vld [vmem:[%s2059 + $0x20] sm:$0xff]
  %v2065 = vld [vmem:[%s2059 + $0x28] sm:$0xff]
  %v2066 = vld [vmem:[%s2059 + $0x30] sm:$0xff]
  %v2067 = vld [vmem:[%s2059 + $0x38] sm:$0xff]
  %v2068 = vld [vmem:[%s2059 + $0x40] sm:$0xff]
  %v2069 = vld [vmem:[%s2059 + $0x48] sm:$0xff]
  %v2070 = vld [vmem:[%s2059 + $0x50] sm:$0xff]
  %v2071 = vld [vmem:[%s2059 + $0x58] sm:$0xff]
  %v2072 = vld [vmem:[%s2059 + $0x60] sm:$0xff]
  %v2073 = vld [vmem:[%s2059 + $0x68] sm:$0xff]
  %v2074 = vld [vmem:[%s2059 + $0x70] sm:$0xff]
  %v2075 = vld [vmem:[%s2059 + $0x78] sm:$0xff]
  %2076 = vmatprep.subr.mxu0 0.0
  %2077 = vmatpush1.msra.mxu0 %v2060
  %2078 = vmatprep.subr.mxu0 0.0
  %2079 = vmatpush1.msra.mxu0 %v2061
  %2080 = vmatprep.subr.mxu0 0.0
  %2081 = vmatpush1.msra.mxu0 %v2062
  %2082 = vmatprep.subr.mxu0 0.0
  %2083 = vmatpush1.msra.mxu0 %v2063
  %2084 = vmatprep.subr.mxu0 0.0
  %2085 = vmatpush1.msra.mxu0 %v2064
  %2086 = vmatprep.subr.mxu0 0.0
  %2087 = vmatpush1.msra.mxu0 %v2065
  %2088 = vmatprep.subr.mxu0 0.0
  %2089 = vmatpush1.msra.mxu0 %v2066
  %2090 = vmatprep.subr.mxu0 0.0
  %2091 = vmatpush1.msra.mxu0 %v2067
  %2092 = vmatprep.subr.mxu0 0.0
  %2093 = vmatpush1.msra.mxu0 %v2068
  %2094 = vmatprep.subr.mxu0 0.0
  %2095 = vmatpush1.msra.mxu0 %v2069
  %2096 = vmatprep.subr.mxu0 0.0
  %2097 = vmatpush1.msra.mxu0 %v2070
  %2098 = vmatprep.subr.mxu0 0.0
  %2099 = vmatpush1.msra.mxu0 %v2071
  %2100 = vmatprep.subr.mxu0 0.0
  %2101 = vmatpush1.msra.mxu0 %v2072
  %2102 = vmatprep.subr.mxu0 0.0
  %2103 = vmatpush1.msra.mxu0 %v2073
  %2104 = vmatprep.subr.mxu0 0.0
  %2105 = vmatpush1.msra.mxu0 %v2074
  %2106 = vmatprep.subr.mxu0 0.0
  %2107 = vmatpush1.msra.mxu0 %v2075
  %2108 = vmatprep.subr.mxu0 0.0
  %2109 = vmatpush1.msra.mxu0 0.0
  %2110 = vmatprep.subr.mxu0 0.0
  %2111 = vmatpush1.msra.mxu0 0.0
  %2112 = vmatprep.subr.mxu0 0.0
  %2113 = vmatpush1.msra.mxu0 0.0
  %2114 = vmatprep.subr.mxu0 0.0
  %2115 = vmatpush1.msra.mxu0 0.0
  %2116 = vmatprep.subr.mxu0 0.0
  %2117 = vmatpush1.msra.mxu0 0.0
  %2118 = vmatprep.subr.mxu0 0.0
  %2119 = vmatpush1.msra.mxu0 0.0
  %2120 = vmatprep.subr.mxu0 0.0
  %2121 = vmatpush1.msra.mxu0 0.0
  %2122 = vmatprep.subr.mxu0 0.0
  %2123 = vmatpush1.msra.mxu0 0.0
  %2124 = vmatprep.subr.mxu0 0.0
  %2125 = vmatpush1.msra.mxu0 0.0
  %2126 = vmatprep.subr.mxu0 0.0
  %2127 = vmatpush1.msra.mxu0 0.0
  %2128 = vmatprep.subr.mxu0 0.0
  %2129 = vmatpush1.msra.mxu0 0.0
  %2130 = vmatprep.subr.mxu0 0.0
  %2131 = vmatpush1.msra.mxu0 0.0
  %2132 = vmatprep.subr.mxu0 0.0
  %2133 = vmatpush1.msra.mxu0 0.0
  %2134 = vmatprep.subr.mxu0 0.0
  %2135 = vmatpush1.msra.mxu0 0.0
  %2136 = vmatprep.subr.mxu0 0.0
  %2137 = vmatpush1.msra.mxu0 0.0
  %2138 = vmatprep.subr.mxu0 0.0
  %2139 = vmatpush1.msra.mxu0 0.0
  %2140 = vmatprep.mubr.f32.mxu0 0.0
  %2141 = vmatmul.mubr.f32.gmra.mrb[0].mxu0 %v2043
  %v2142 = vpop.f32.mrb[0].mxu0
  %v2143 = vadd.f32 0.0, %v2142
  %v2144 = vpop.f32.mrb[0].mxu0
  %2145 = vmatprep.mubr.f32.mxu0 0.0
  %2146 = vmatmul.mubr.f32.gmra.mrb[0].mxu0 %v2044
  %v2147 = vpop.f32.mrb[0].mxu0
  %v2148 = vadd.f32 0.0, %v2147
  %v2149 = vpop.f32.mrb[0].mxu0
  %2150 = vmatprep.mubr.f32.mxu0 0.0
  %2151 = vmatmul.mubr.f32.gmra.mrb[0].mxu0 %v2045
  %v2152 = vpop.f32.mrb[0].mxu0
  %v2153 = vadd.f32 0.0, %v2152
  %v2154 = vpop.f32.mrb[0].mxu0
  %2155 = vmatprep.mubr.f32.mxu0 0.0
  %2156 = vmatmul.mubr.f32.gmra.mrb[0].mxu0 %v2046
  %v2157 = vpop.f32.mrb[0].mxu0
  %v2158 = vadd.f32 0.0, %v2157
  %v2159 = vpop.f32.mrb[0].mxu0
  %2160 = vmatprep.mubr.f32.mxu0 0.0
  %2161 = vmatmul.mubr.f32.gmra.mrb[0].mxu0 %v2047
  %v2162 = vpop.f32.mrb[0].mxu0
  %v2163 = vadd.f32 0.0, %v2162
  %v2164 = vpop.f32.mrb[0].mxu0
  %2165 = vmatprep.mubr.f32.mxu0 0.0
  %2166 = vmatmul.mubr.f32.gmra.mrb[0].mxu0 %v2048
  %v2167 = vpop.f32.mrb[0].mxu0
  %v2168 = vadd.f32 0.0, %v2167
  %v2169 = vpop.f32.mrb[0].mxu0
  %2170 = vmatprep.mubr.f32.mxu0 0.0
  %2171 = vmatmul.mubr.f32.gmra.mrb[0].mxu0 %v2049
  %v2172 = vpop.f32.mrb[0].mxu0
  %v2173 = vadd.f32 0.0, %v2172
  %v2174 = vpop.f32.mrb[0].mxu0
  %2175 = vmatprep.mubr.f32.mxu0 0.0
  %2176 = vmatmul.mubr.f32.gmra.mrb[0].mxu0 %v2050
  %v2177 = vpop.f32.mrb[0].mxu0
  %v2178 = vadd.f32 0.0, %v2177
  %v2179 = vpop.f32.mrb[0].mxu0
  %2180 = vmatprep.mubr.f32.mxu0 0.0
  %2181 = vmatmul.mubr.f32.gmra.mrb[0].mxu0 %v2051
  %v2182 = vpop.f32.mrb[0].mxu0
  %v2183 = vadd.f32 0.0, %v2182
  %v2184 = vpop.f32.mrb[0].mxu0
  %2185 = vmatprep.mubr.f32.mxu0 0.0
  %2186 = vmatmul.mubr.f32.gmra.mrb[0].mxu0 %v2052
  %v2187 = vpop.f32.mrb[0].mxu0
  %v2188 = vadd.f32 0.0, %v2187
  %v2189 = vpop.f32.mrb[0].mxu0
  %2190 = vmatprep.mubr.f32.mxu0 0.0
  %2191 = vmatmul.mubr.f32.gmra.mrb[0].mxu0 %v2053
  %v2192 = vpop.f32.mrb[0].mxu0
  %v2193 = vadd.f32 0.0, %v2192
  %v2194 = vpop.f32.mrb[0].mxu0
  %2195 = vmatprep.mubr.f32.mxu0 0.0
  %2196 = vmatmul.mubr.f32.gmra.mrb[0].mxu0 %v2054
  %v2197 = vpop.f32.mrb[0].mxu0
  %v2198 = vadd.f32 0.0, %v2197
  %v2199 = vpop.f32.mrb[0].mxu0
  %2200 = vmatprep.mubr.f32.mxu0 0.0
  %2201 = vmatmul.mubr.f32.gmra.mrb[0].mxu0 %v2055
  %v2202 = vpop.f32.mrb[0].mxu0
  %v2203 = vadd.f32 0.0, %v2202
  %v2204 = vpop.f32.mrb[0].mxu0
  %2205 = vmatprep.mubr.f32.mxu0 0.0
  %2206 = vmatmul.mubr.f32.gmra.mrb[0].mxu0 %v2056
  %v2207 = vpop.f32.mrb[0].mxu0
  %v2208 = vadd.f32 0.0, %v2207
  %v2209 = vpop.f32.mrb[0].mxu0
  %2210 = vmatprep.mubr.f32.mxu0 0.0
  %2211 = vmatmul.mubr.f32.gmra.mrb[0].mxu0 %v2057
  %v2212 = vpop.f32.mrb[0].mxu0
  %v2213 = vadd.f32 0.0, %v2212
  %v2214 = vpop.f32.mrb[0].mxu0
  %2215 = vmatprep.mubr.f32.mxu0 0.0
  %2216 = vmatmul.mubr.f32.gmra.mrb[0].mxu0 %v2058
  %v2217 = vpop.f32.mrb[0].mxu0
  %v2218 = vadd.f32 0.0, %v2217
  %v2219 = vpop.f32.mrb[0].mxu0
  %2220 = vdwg.mxu0
  %v2221 = vadd.f32 %v2027, %v2143
  %v2222 = vadd.f32 %v2028, %v2148
  %v2223 = vadd.f32 %v2029, %v2153
  %v2224 = vadd.f32 %v2030, %v2158
  %v2225 = vadd.f32 %v2031, %v2163
  %v2226 = vadd.f32 %v2032, %v2168
  %v2227 = vadd.f32 %v2033, %v2173
  %v2228 = vadd.f32 %v2034, %v2178
  %v2229 = vadd.f32 %v2035, %v2183
  %v2230 = vadd.f32 %v2036, %v2188
  %v2231 = vadd.f32 %v2037, %v2193
  %v2232 = vadd.f32 %v2038, %v2198
  %v2233 = vadd.f32 %v2039, %v2203
  %v2234 = vadd.f32 %v2040, %v2208
  %v2235 = vadd.f32 %v2041, %v2213
  %v2236 = vadd.f32 %v2042, %v2218
  %v2237 = vmax.f32 %v2221, 0.0
  %v2238 = vmax.f32 %v2222, 0.0
  %v2239 = vmax.f32 %v2223, 0.0
  %v2240 = vmax.f32 %v2224, 0.0
  %v2241 = vmax.f32 %v2225, 0.0
  %v2242 = vmax.f32 %v2226, 0.0
  %v2243 = vmax.f32 %v2227, 0.0
  %v2244 = vmax.f32 %v2228, 0.0
  %v2245 = vmax.f32 %v2229, 0.0
  %v2246 = vmax.f32 %v2230, 0.0
  %v2247 = vmax.f32 %v2231, 0.0
  %v2248 = vmax.f32 %v2232, 0.0
  %v2249 = vmax.f32 %v2233, 0.0
  %v2250 = vmax.f32 %v2234, 0.0
  %v2251 = vmax.f32 %v2235, 0.0
  %v2252 = vmax.f32 %v2236, 0.0
  %2253 = vst [vmem:[%s6] sm:$0xff] %v2237
  %2254 = vst [vmem:[%s6 + $0x8] sm:$0xff] %v2238
  %2255 = vst [vmem:[%s6 + $0x10] sm:$0xff] %v2239
  %2256 = vst [vmem:[%s6 + $0x18] sm:$0xff] %v2240
  %2257 = vst [vmem:[%s6 + $0x20] sm:$0xff] %v2241
  %2258 = vst [vmem:[%s6 + $0x28] sm:$0xff] %v2242
  %2259 = vst [vmem:[%s6 + $0x30] sm:$0xff] %v2243
  %2260 = vst [vmem:[%s6 + $0x38] sm:$0xff] %v2244
  %2261 = vst [vmem:[%s6 + $0x40] sm:$0xff] %v2245
  %2262 = vst [vmem:[%s6 + $0x48] sm:$0xff] %v2246
  %2263 = vst [vmem:[%s6 + $0x50] sm:$0xff] %v2247
  %2264 = vst [vmem:[%s6 + $0x58] sm:$0xff] %v2248
  %2265 = vst [vmem:[%s6 + $0x60] sm:$0xff] %v2249
  %2266 = vst [vmem:[%s6 + $0x68] sm:$0xff] %v2250
  %2267 = vst [vmem:[%s6 + $0x70] sm:$0xff] %v2251
  %2268 = vst [vmem:[%s6 + $0x78] sm:$0xff] %v2252
  // Predicated region
  $region26: #{basic_block_forward.1} parent=0 // pred_check
    _
  $region27: #{basic_block_forward.1} parent=0 // pred_check_branch
    %2270 = sbr.rel (0) target = $region29
  $region28: #{basic_block_forward.1} parent=0 // pred_region
    _
  $region29: #{basic_block_forward.1} parent=0 // pred_fallthru
    _
  // Predicated region
  $region30: #{basic_block_forward.1} parent=0 // pred_check
    _
  $region31: #{basic_block_forward.1} parent=0 // pred_check_branch
    %2272 = sbr.rel (0) target = $region33
  $region32: #{basic_block_forward.1} parent=0 // pred_region
    _
  $region33: #{basic_block_forward.1} parent=0 // pred_fallthru
    _

</llo_original>
